<compile_context>
chip_gen: v7x
topology: tpu7x:2x2x1
jax: 0.10.0
libtpu: 0.0.40
codegen_flags: <defaults>
</compile_context>

<pallas_src>
import functools

import jax
import jax.numpy as jnp
from jax.experimental import pallas as pl
from jax.experimental.pallas import tpu as pltpu


# ------------------------------ Fused kernel ------------------------------- #

def _fused_attention_kernel(x_ref, wq_ref, bq_ref, wkv_ref, bkv_ref,
                            wo_ref, bo_ref, o_ref,
                            *, num_heads, q_block, matmul_dtype):
    # x_ref:   (S, D)        full-sequence activations for this batch element
    # wq_ref:  (D, D)        pre-transposed, scale-folded Wq^T
    # bq_ref:  (1, D)        scale-folded bq
    # wkv_ref: (D, 2D)       pre-transposed [Wk ; Wv]^T
    # bkv_ref: (1, 2D)
    # wo_ref:  (D, D)        pre-transposed Wo^T
    # bo_ref:  (1, D)
    # o_ref:   (q_block, D)  output rows for this (batch, query-block) step
    S, D = x_ref.shape
    d_head = D // num_heads
    qi = pl.program_id(1)

    # MXU operands in matmul_dtype (bf16 by default); accumulation and all
    # softmax math stay in f32.
    x_kv = x_ref[...].astype(matmul_dtype)                               # (S, D)
    q_start = pl.multiple_of(qi * q_block, q_block)
    x_q = x_ref[pl.ds(q_start, q_block), :].astype(matmul_dtype)         # (tq, D)

    wq = wq_ref[...].astype(matmul_dtype)                                # (D, D)
    wkv = wkv_ref[...].astype(matmul_dtype)                              # (D, 2D)
    wo = wo_ref[...].astype(matmul_dtype)                                # (D, D)

    # Projections: Q only for this query block (attention scale folded into
    # wq/bq), K/V for the full sequence.  Cast to matmul_dtype once, here.
    q_all = (jnp.dot(x_q, wq, preferred_element_type=jnp.float32)
             + bq_ref[...]).astype(matmul_dtype)                         # (tq, D)
    kv_all = (jnp.dot(x_kv, wkv, preferred_element_type=jnp.float32)
              + bkv_ref[...]).astype(matmul_dtype)                       # (S, 2D)

    # Per-head attention with the output projection fused into the loop.
    # (For very large num_heads, move heads onto a grid axis / fori_loop to
    # bound live ranges; at small H the static loop keeps scheduling simple.)
    out_acc = jnp.zeros((q_block, D), jnp.float32)
    for h in range(num_heads):
        lo, hi = h * d_head, (h + 1) * d_head
        q = q_all[:, lo:hi]                                              # (tq, Dh)
        k = kv_all[:, lo:hi]                                             # (S, Dh)
        v = kv_all[:, D + lo:D + hi]                                     # (S, Dh)

        # q @ k^T without an in-kernel transpose (contract on dim 1).
        scores = jax.lax.dot_general(
            q, k, dimension_numbers=(((1,), (1,)), ((), ())),
            preferred_element_type=jnp.float32)                          # (tq, S) f32

        m = jnp.max(scores, axis=-1, keepdims=True)
        e = jnp.exp(scores - m)                                          # f32 softmax math
        denom = jnp.sum(e, axis=-1, keepdims=True)                       # (tq, 1)

        pv = jnp.dot(e.astype(matmul_dtype), v,
                     preferred_element_type=jnp.float32)                 # (tq, Dh)
        # Deferred, exact normalization (tq*Dh multiplies instead of tq*S).
        p = (pv * pl.reciprocal(denom, approx=False)).astype(matmul_dtype)

        # Fused output projection: this head's d_head-row slab of Wo^T.
        out_acc = out_acc + jnp.dot(p, wo[lo:hi, :],
                                    preferred_element_type=jnp.float32)

    o_ref[...] = (out_acc + bo_ref[...]).astype(o_ref.dtype)


# ------------------------------ Module wrapper ------------------------------ #

def neuron_optimized_attention(params, x, num_heads, *,
                               matmul_dtype=jnp.bfloat16, q_block=None):
    """Forward pass of NeuronOptimizedAttention. x: (B, S, d_model)."""
    B, S, D = x.shape
    assert D % num_heads == 0, "num_heads must divide d_model"
    d_head = D // num_heads
    scale = 1.0 / (d_head ** 0.5)

    wq, bq = params["q_proj"]
    wk, bk = params["k_proj"]
    wv, bv = params["v_proj"]
    wo, bo = params["out_proj"]

    # Pre-transpose weights so the kernel never transposes a tile; fold the
    # attention scale into the Q projection (scale*(x@Wq^T + bq) ==
    # x@(scale*Wq)^T + scale*bq) and fuse K/V into one lane-dense (D, 2D)
    # operand.
    wq_t = (wq * scale).T                                       # (D, D)
    bq2 = (bq * scale).reshape(1, D)
    wkv_t = jnp.concatenate([wk, wv], axis=0).T                 # (D, 2D)
    bkv2 = jnp.concatenate([bk, bv]).reshape(1, 2 * D)
    wo_t = wo.T                                                 # (D, D)
    bo2 = bo.reshape(1, D)

    # Query-block grid axis: bounds per-step f32 scores to (q_block, S) per
    # head and gives the pipeline / megacore something to shard besides batch.
    if q_block is None:
        q_block = S if S <= 256 else 256
    assert S % q_block == 0 and (q_block == S or q_block % 8 == 0)
    nq = S // q_block

    # Explicit scoped-VMEM budget sized to the actual footprint (resident
    # weights + double-buffered activation blocks + per-head working set),
    # clamped to stay under every generation's physical per-TC VMEM.
    f32b = 4
    weight_vmem = (4 * D * D + 4 * D) * f32b
    act_vmem = 2 * (S * D + q_block * D) * f32b
    work_vmem = 2 * (q_block * 3 * D + 2 * S * D + q_block * S
                     + 2 * q_block * D) * f32b
    vmem_limit = int(1.25 * (weight_vmem + act_vmem + work_vmem))
    vmem_limit = max(16 << 20, min(vmem_limit, 64 << 20))

    kern = functools.partial(_fused_attention_kernel, num_heads=num_heads,
                             q_block=q_block, matmul_dtype=matmul_dtype)

    return pl.pallas_call(
        kern,
        out_shape=jax.ShapeDtypeStruct((B, S, D), x.dtype),
        grid=(B, nq),
        in_specs=[
            # Full-sequence x per batch (same block for every query step ->
            # stays resident, no re-DMA); leading batch dim squeezed away.
            pl.BlockSpec((pl.Squeezed(), S, D), lambda b, qi: (b, 0, 0)),
            # Weights/biases: same block every grid step -> VMEM-resident.
            pl.BlockSpec((D, D), lambda b, qi: (0, 0)),
            pl.BlockSpec((1, D), lambda b, qi: (0, 0)),
            pl.BlockSpec((D, 2 * D), lambda b, qi: (0, 0)),
            pl.BlockSpec((1, 2 * D), lambda b, qi: (0, 0)),
            pl.BlockSpec((D, D), lambda b, qi: (0, 0)),
            pl.BlockSpec((1, D), lambda b, qi: (0, 0)),
        ],
        out_specs=pl.BlockSpec((pl.Squeezed(), q_block, D),
                               lambda b, qi: (b, qi, 0)),
        compiler_params=pltpu.CompilerParams(
            dimension_semantics=("parallel", "parallel"),
            vmem_limit_bytes=vmem_limit),
    )(x, wq_t, bq2, wkv_t, bkv2, wo_t, bo2)


# ------------------------------ Params / reference -------------------------- #

def init_params(key, d_model):
    """Deterministic synthetic parameters (PyTorch-like uniform init)."""
    keys = jax.random.split(key, 8)
    bound = 1.0 / (d_model ** 0.5)

    def lin(kw, kb):
        w = jax.random.uniform(kw, (d_model, d_model), jnp.float32, -bound, bound)
        b = jax.random.uniform(kb, (d_model,), jnp.float32, -bound, bound)
        return w, b

    return {
        "q_proj": lin(keys[0], keys[1]),
        "k_proj": lin(keys[2], keys[3]),
        "v_proj": lin(keys[4], keys[5]),
        "out_proj": lin(keys[6], keys[7]),
    }


def _reference(params, x, num_heads):
    B, S, D = x.shape
    d_head = D // num_heads
    scale = 1.0 / (d_head ** 0.5)

    def lin(x2, wb):
        w, b = wb
        return x2 @ w.T + b

    q = lin(x, params["q_proj"]).reshape(B, S, num_heads, d_head).transpose(0, 2, 1, 3)
    k = lin(x, params["k_proj"]).reshape(B, S, num_heads, d_head).transpose(0, 2, 1, 3)
    v = lin(x, params["v_proj"]).reshape(B, S, num_heads, d_head).transpose(0, 2, 1, 3)
    s = jnp.einsum("bhqd,bhkd->bhqk", q, k) * scale
    w = jax.nn.softmax(s, axis=-1)
    o = jnp.einsum("bhqk,bhkd->bhqd", w, v)
    o = o.transpose(0, 2, 1, 3).reshape(B, S, D)
    return lin(o, params["out_proj"])


if __name__ == "__main__":
    B, S, D, H = 2, 16, 32, 4   # batch, seq, d_model, num_heads (d_head = 8)

    key = jax.random.PRNGKey(0)
    pkey, xkey = jax.random.split(key)
    params = init_params(pkey, D)
    x = jax.random.normal(xkey, (B, S, D), dtype=jnp.float32)

    ref = _reference(params, x, H)

    # Default path: bf16 MXU operands, single full-S query block per batch.
    out_bf16 = jax.block_until_ready(neuron_optimized_attention(params, x, H))
    # f32 MXU operands, exercising the query-block grid axis (nq = 2).
    out_f32 = jax.block_until_ready(
        neuron_optimized_attention(params, x, H,
                                   matmul_dtype=jnp.float32, q_block=8))

    assert out_bf16.shape == (B, S, D) and out_f32.shape == (B, S, D)
    # f32 operands + exact reciprocal: tight agreement with the XLA reference.
    assert jnp.allclose(out_f32, ref, atol=2e-2, rtol=2e-2)
    # bf16 operand quantization is the standard flash-attention tradeoff;
    # tolerance derived for bf16 rather than reusing the f32 threshold.
    assert jnp.allclose(out_bf16, ref, atol=5e-2, rtol=5e-2)

    print("KERNEL_OK")
</pallas_src>

<mosaic_0001>
module attributes {stable_mosaic.version = 11 : i64} {
  func.func @_fused_attention_kernel(%arg0: i32, %arg1: i32, %arg2: memref<1x16x32xf32, #tpu.memory_space<vmem>>, %arg3: memref<32x32xf32, #tpu.memory_space<vmem>>, %arg4: memref<1x32xf32, #tpu.memory_space<vmem>>, %arg5: memref<32x64xf32, #tpu.memory_space<vmem>>, %arg6: memref<1x64xf32, #tpu.memory_space<vmem>>, %arg7: memref<32x32xf32, #tpu.memory_space<vmem>>, %arg8: memref<1x32xf32, #tpu.memory_space<vmem>>, %arg9: memref<1x16x32xf32, #tpu.memory_space<vmem>>) attributes {dimension_semantics = [#tpu.dimension_semantics<parallel>, #tpu.dimension_semantics<parallel>], iteration_bounds = array<i64: 2, 1>, scalar_prefetch = 0 : i64, scratch_operands = 0 : i64, tpu.core_type = #tpu.core_type<tc>, window_params = [{transform_indices = @transform_0, window_bounds = array<i64: 1, 16, 32>}, {pipeline_mode = #tpu.pipeline_mode<synchronous>, transform_indices = @transform_1, window_bounds = array<i64: 32, 32>}, {pipeline_mode = #tpu.pipeline_mode<synchronous>, transform_indices = @transform_2, window_bounds = array<i64: 1, 32>}, {pipeline_mode = #tpu.pipeline_mode<synchronous>, transform_indices = @transform_3, window_bounds = array<i64: 32, 64>}, {pipeline_mode = #tpu.pipeline_mode<synchronous>, transform_indices = @transform_4, window_bounds = array<i64: 1, 64>}, {pipeline_mode = #tpu.pipeline_mode<synchronous>, transform_indices = @transform_5, window_bounds = array<i64: 32, 32>}, {pipeline_mode = #tpu.pipeline_mode<synchronous>, transform_indices = @transform_6, window_bounds = array<i64: 1, 32>}, {transform_indices = @transform_7, window_bounds = array<i64: 1, 16, 32>}]} {
    %c0 = arith.constant 0 : index
    %c0_0 = arith.constant 0 : index
    %c0_1 = arith.constant 0 : index
    %0 = vector.load %arg2[%c0, %c0_0, %c0_1] : memref<1x16x32xf32, #tpu.memory_space<vmem>>, vector<1x16x32xf32>
    %1 = vector.shape_cast %0 : vector<1x16x32xf32> to vector<16x32xf32>
    %2 = arith.truncf %1 : vector<16x32xf32> to vector<16x32xbf16>
    %c16_i32 = arith.constant 16 : i32
    %3 = arith.muli %arg1, %c16_i32 : i32
    %4 = tpu.assume_multiple %3, 16 : i32
    %c0_2 = arith.constant 0 : index
    %5 = arith.index_cast %4 : i32 to index
    %c0_3 = arith.constant 0 : index
    %6 = vector.load %arg2[%c0_2, %5, %c0_3] : memref<1x16x32xf32, #tpu.memory_space<vmem>>, vector<1x16x32xf32>
    %7 = vector.shape_cast %6 : vector<1x16x32xf32> to vector<16x32xf32>
    %8 = arith.truncf %7 : vector<16x32xf32> to vector<16x32xbf16>
    %c0_4 = arith.constant 0 : index
    %c0_5 = arith.constant 0 : index
    %9 = vector.load %arg3[%c0_4, %c0_5] : memref<32x32xf32, #tpu.memory_space<vmem>>, vector<32x32xf32>
    %10 = arith.truncf %9 : vector<32x32xf32> to vector<32x32xbf16>
    %c0_6 = arith.constant 0 : index
    %c0_7 = arith.constant 0 : index
    %11 = vector.load %arg5[%c0_6, %c0_7] : memref<32x64xf32, #tpu.memory_space<vmem>>, vector<32x64xf32>
    %12 = arith.truncf %11 : vector<32x64xf32> to vector<32x64xbf16>
    %c0_8 = arith.constant 0 : index
    %c0_9 = arith.constant 0 : index
    %13 = vector.load %arg7[%c0_8, %c0_9] : memref<32x32xf32, #tpu.memory_space<vmem>>, vector<32x32xf32>
    %14 = arith.truncf %13 : vector<32x32xf32> to vector<32x32xbf16>
    %cst = arith.constant dense<0.000000e+00> : vector<16x32xf32>
    %15 = tpu.matmul %8, %10, %cst {dimension_numbers = #tpu.dot_dimension_numbers<[1], [0], [0], [1], [0, 0, 1, 1], [], []>} : vector<16x32xbf16>, vector<32x32xbf16>, vector<16x32xf32> -> vector<16x32xf32>
    %c0_10 = arith.constant 0 : index
    %c0_11 = arith.constant 0 : index
    %16 = vector.load %arg4[%c0_10, %c0_11] : memref<1x32xf32, #tpu.memory_space<vmem>>, vector<1x32xf32>
    %17 = vector.broadcast %16 : vector<1x32xf32> to vector<16x32xf32>
    %18 = arith.addf %15, %17 : vector<16x32xf32>
    %19 = arith.truncf %18 : vector<16x32xf32> to vector<16x32xbf16>
    %cst_12 = arith.constant dense<0.000000e+00> : vector<16x64xf32>
    %20 = tpu.matmul %2, %12, %cst_12 {dimension_numbers = #tpu.dot_dimension_numbers<[1], [0], [0], [1], [0, 0, 1, 1], [], []>} : vector<16x32xbf16>, vector<32x64xbf16>, vector<16x64xf32> -> vector<16x64xf32>
    %c0_13 = arith.constant 0 : index
    %c0_14 = arith.constant 0 : index
    %21 = vector.load %arg6[%c0_13, %c0_14] : memref<1x64xf32, #tpu.memory_space<vmem>>, vector<1x64xf32>
    %22 = vector.broadcast %21 : vector<1x64xf32> to vector<16x64xf32>
    %23 = arith.addf %20, %22 : vector<16x64xf32>
    %24 = arith.truncf %23 : vector<16x64xf32> to vector<16x64xbf16>
    %cst_15 = arith.constant 0.000000e+00 : f32
    %25 = vector.broadcast %cst_15 : f32 to vector<16x32xf32>
    %26 = vector.extract_strided_slice %19 {offsets = [0, 0], sizes = [16, 8], strides = [1, 1]} : vector<16x32xbf16> to vector<16x8xbf16>
    %27 = vector.extract_strided_slice %24 {offsets = [0, 0], sizes = [16, 8], strides = [1, 1]} : vector<16x64xbf16> to vector<16x8xbf16>
    %28 = vector.extract_strided_slice %24 {offsets = [0, 32], sizes = [16, 8], strides = [1, 1]} : vector<16x64xbf16> to vector<16x8xbf16>
    %cst_16 = arith.constant dense<0.000000e+00> : vector<16x16xf32>
    %29 = tpu.matmul %26, %27, %cst_16 {dimension_numbers = #tpu.dot_dimension_numbers<[1], [1], [0], [0], [0, 0, 1, 0], [], []>} : vector<16x8xbf16>, vector<16x8xbf16>, vector<16x16xf32> -> vector<16x16xf32>
    %cst_17 = arith.constant dense<0xFF800000> : vector<16xf32>
    %30 = vector.multi_reduction <maximumf>, %29, %cst_17 [1] : vector<16x16xf32> to vector<16xf32>
    %31 = vector.shape_cast %30 : vector<16xf32> to vector<16x1xf32>
    %32 = vector.broadcast %31 : vector<16x1xf32> to vector<16x16xf32>
    %33 = arith.subf %29, %32 : vector<16x16xf32>
    %34 = math.exp %33 : vector<16x16xf32>
    %cst_18 = arith.constant dense<0.000000e+00> : vector<16xf32>
    %35 = vector.multi_reduction <add>, %34, %cst_18 [1] : vector<16x16xf32> to vector<16xf32>
    %36 = vector.shape_cast %35 : vector<16xf32> to vector<16x1xf32>
    %37 = arith.truncf %34 : vector<16x16xf32> to vector<16x16xbf16>
    %cst_19 = arith.constant dense<0.000000e+00> : vector<16x8xf32>
    %38 = tpu.matmul %37, %28, %cst_19 {dimension_numbers = #tpu.dot_dimension_numbers<[1], [0], [0], [1], [0, 0, 1, 1], [], []>} : vector<16x16xbf16>, vector<16x8xbf16>, vector<16x8xf32> -> vector<16x8xf32>
    %39 = tpu.reciprocal %36 : vector<16x1xf32> -> vector<16x1xf32>
    %40 = vector.broadcast %39 : vector<16x1xf32> to vector<16x8xf32>
    %41 = arith.mulf %38, %40 : vector<16x8xf32>
    %42 = arith.truncf %41 : vector<16x8xf32> to vector<16x8xbf16>
    %43 = vector.extract_strided_slice %14 {offsets = [0, 0], sizes = [8, 32], strides = [1, 1]} : vector<32x32xbf16> to vector<8x32xbf16>
    %cst_20 = arith.constant dense<0.000000e+00> : vector<16x32xf32>
    %44 = tpu.matmul %42, %43, %cst_20 {dimension_numbers = #tpu.dot_dimension_numbers<[1], [0], [0], [1], [0, 0, 1, 1], [], []>} : vector<16x8xbf16>, vector<8x32xbf16>, vector<16x32xf32> -> vector<16x32xf32>
    %45 = arith.addf %25, %44 : vector<16x32xf32>
    %46 = vector.extract_strided_slice %19 {offsets = [0, 8], sizes = [16, 8], strides = [1, 1]} : vector<16x32xbf16> to vector<16x8xbf16>
    %47 = vector.extract_strided_slice %24 {offsets = [0, 8], sizes = [16, 8], strides = [1, 1]} : vector<16x64xbf16> to vector<16x8xbf16>
    %48 = vector.extract_strided_slice %24 {offsets = [0, 40], sizes = [16, 8], strides = [1, 1]} : vector<16x64xbf16> to vector<16x8xbf16>
    %cst_21 = arith.constant dense<0.000000e+00> : vector<16x16xf32>
    %49 = tpu.matmul %46, %47, %cst_21 {dimension_numbers = #tpu.dot_dimension_numbers<[1], [1], [0], [0], [0, 0, 1, 0], [], []>} : vector<16x8xbf16>, vector<16x8xbf16>, vector<16x16xf32> -> vector<16x16xf32>
    %cst_22 = arith.constant dense<0xFF800000> : vector<16xf32>
    %50 = vector.multi_reduction <maximumf>, %49, %cst_22 [1] : vector<16x16xf32> to vector<16xf32>
    %51 = vector.shape_cast %50 : vector<16xf32> to vector<16x1xf32>
    %52 = vector.broadcast %51 : vector<16x1xf32> to vector<16x16xf32>
    %53 = arith.subf %49, %52 : vector<16x16xf32>
    %54 = math.exp %53 : vector<16x16xf32>
    %cst_23 = arith.constant dense<0.000000e+00> : vector<16xf32>
    %55 = vector.multi_reduction <add>, %54, %cst_23 [1] : vector<16x16xf32> to vector<16xf32>
    %56 = vector.shape_cast %55 : vector<16xf32> to vector<16x1xf32>
    %57 = arith.truncf %54 : vector<16x16xf32> to vector<16x16xbf16>
    %cst_24 = arith.constant dense<0.000000e+00> : vector<16x8xf32>
    %58 = tpu.matmul %57, %48, %cst_24 {dimension_numbers = #tpu.dot_dimension_numbers<[1], [0], [0], [1], [0, 0, 1, 1], [], []>} : vector<16x16xbf16>, vector<16x8xbf16>, vector<16x8xf32> -> vector<16x8xf32>
    %59 = tpu.reciprocal %56 : vector<16x1xf32> -> vector<16x1xf32>
    %60 = vector.broadcast %59 : vector<16x1xf32> to vector<16x8xf32>
    %61 = arith.mulf %58, %60 : vector<16x8xf32>
    %62 = arith.truncf %61 : vector<16x8xf32> to vector<16x8xbf16>
    %63 = vector.extract_strided_slice %14 {offsets = [8, 0], sizes = [8, 32], strides = [1, 1]} : vector<32x32xbf16> to vector<8x32xbf16>
    %cst_25 = arith.constant dense<0.000000e+00> : vector<16x32xf32>
    %64 = tpu.matmul %62, %63, %cst_25 {dimension_numbers = #tpu.dot_dimension_numbers<[1], [0], [0], [1], [0, 0, 1, 1], [], []>} : vector<16x8xbf16>, vector<8x32xbf16>, vector<16x32xf32> -> vector<16x32xf32>
    %65 = arith.addf %45, %64 : vector<16x32xf32>
    %66 = vector.extract_strided_slice %19 {offsets = [0, 16], sizes = [16, 8], strides = [1, 1]} : vector<16x32xbf16> to vector<16x8xbf16>
    %67 = vector.extract_strided_slice %24 {offsets = [0, 16], sizes = [16, 8], strides = [1, 1]} : vector<16x64xbf16> to vector<16x8xbf16>
    %68 = vector.extract_strided_slice %24 {offsets = [0, 48], sizes = [16, 8], strides = [1, 1]} : vector<16x64xbf16> to vector<16x8xbf16>
    %cst_26 = arith.constant dense<0.000000e+00> : vector<16x16xf32>
    %69 = tpu.matmul %66, %67, %cst_26 {dimension_numbers = #tpu.dot_dimension_numbers<[1], [1], [0], [0], [0, 0, 1, 0], [], []>} : vector<16x8xbf16>, vector<16x8xbf16>, vector<16x16xf32> -> vector<16x16xf32>
    %cst_27 = arith.constant dense<0xFF800000> : vector<16xf32>
    %70 = vector.multi_reduction <maximumf>, %69, %cst_27 [1] : vector<16x16xf32> to vector<16xf32>
    %71 = vector.shape_cast %70 : vector<16xf32> to vector<16x1xf32>
    %72 = vector.broadcast %71 : vector<16x1xf32> to vector<16x16xf32>
    %73 = arith.subf %69, %72 : vector<16x16xf32>
    %74 = math.exp %73 : vector<16x16xf32>
    %cst_28 = arith.constant dense<0.000000e+00> : vector<16xf32>
    %75 = vector.multi_reduction <add>, %74, %cst_28 [1] : vector<16x16xf32> to vector<16xf32>
    %76 = vector.shape_cast %75 : vector<16xf32> to vector<16x1xf32>
    %77 = arith.truncf %74 : vector<16x16xf32> to vector<16x16xbf16>
    %cst_29 = arith.constant dense<0.000000e+00> : vector<16x8xf32>
    %78 = tpu.matmul %77, %68, %cst_29 {dimension_numbers = #tpu.dot_dimension_numbers<[1], [0], [0], [1], [0, 0, 1, 1], [], []>} : vector<16x16xbf16>, vector<16x8xbf16>, vector<16x8xf32> -> vector<16x8xf32>
    %79 = tpu.reciprocal %76 : vector<16x1xf32> -> vector<16x1xf32>
    %80 = vector.broadcast %79 : vector<16x1xf32> to vector<16x8xf32>
    %81 = arith.mulf %78, %80 : vector<16x8xf32>
    %82 = arith.truncf %81 : vector<16x8xf32> to vector<16x8xbf16>
    %83 = vector.extract_strided_slice %14 {offsets = [16, 0], sizes = [8, 32], strides = [1, 1]} : vector<32x32xbf16> to vector<8x32xbf16>
    %cst_30 = arith.constant dense<0.000000e+00> : vector<16x32xf32>
    %84 = tpu.matmul %82, %83, %cst_30 {dimension_numbers = #tpu.dot_dimension_numbers<[1], [0], [0], [1], [0, 0, 1, 1], [], []>} : vector<16x8xbf16>, vector<8x32xbf16>, vector<16x32xf32> -> vector<16x32xf32>
    %85 = arith.addf %65, %84 : vector<16x32xf32>
    %86 = vector.extract_strided_slice %19 {offsets = [0, 24], sizes = [16, 8], strides = [1, 1]} : vector<16x32xbf16> to vector<16x8xbf16>
    %87 = vector.extract_strided_slice %24 {offsets = [0, 24], sizes = [16, 8], strides = [1, 1]} : vector<16x64xbf16> to vector<16x8xbf16>
    %88 = vector.extract_strided_slice %24 {offsets = [0, 56], sizes = [16, 8], strides = [1, 1]} : vector<16x64xbf16> to vector<16x8xbf16>
    %cst_31 = arith.constant dense<0.000000e+00> : vector<16x16xf32>
    %89 = tpu.matmul %86, %87, %cst_31 {dimension_numbers = #tpu.dot_dimension_numbers<[1], [1], [0], [0], [0, 0, 1, 0], [], []>} : vector<16x8xbf16>, vector<16x8xbf16>, vector<16x16xf32> -> vector<16x16xf32>
    %cst_32 = arith.constant dense<0xFF800000> : vector<16xf32>
    %90 = vector.multi_reduction <maximumf>, %89, %cst_32 [1] : vector<16x16xf32> to vector<16xf32>
    %91 = vector.shape_cast %90 : vector<16xf32> to vector<16x1xf32>
    %92 = vector.broadcast %91 : vector<16x1xf32> to vector<16x16xf32>
    %93 = arith.subf %89, %92 : vector<16x16xf32>
    %94 = math.exp %93 : vector<16x16xf32>
    %cst_33 = arith.constant dense<0.000000e+00> : vector<16xf32>
    %95 = vector.multi_reduction <add>, %94, %cst_33 [1] : vector<16x16xf32> to vector<16xf32>
    %96 = vector.shape_cast %95 : vector<16xf32> to vector<16x1xf32>
    %97 = arith.truncf %94 : vector<16x16xf32> to vector<16x16xbf16>
    %cst_34 = arith.constant dense<0.000000e+00> : vector<16x8xf32>
    %98 = tpu.matmul %97, %88, %cst_34 {dimension_numbers = #tpu.dot_dimension_numbers<[1], [0], [0], [1], [0, 0, 1, 1], [], []>} : vector<16x16xbf16>, vector<16x8xbf16>, vector<16x8xf32> -> vector<16x8xf32>
    %99 = tpu.reciprocal %96 : vector<16x1xf32> -> vector<16x1xf32>
    %100 = vector.broadcast %99 : vector<16x1xf32> to vector<16x8xf32>
    %101 = arith.mulf %98, %100 : vector<16x8xf32>
    %102 = arith.truncf %101 : vector<16x8xf32> to vector<16x8xbf16>
    %103 = vector.extract_strided_slice %14 {offsets = [24, 0], sizes = [8, 32], strides = [1, 1]} : vector<32x32xbf16> to vector<8x32xbf16>
    %cst_35 = arith.constant dense<0.000000e+00> : vector<16x32xf32>
    %104 = tpu.matmul %102, %103, %cst_35 {dimension_numbers = #tpu.dot_dimension_numbers<[1], [0], [0], [1], [0, 0, 1, 1], [], []>} : vector<16x8xbf16>, vector<8x32xbf16>, vector<16x32xf32> -> vector<16x32xf32>
    %105 = arith.addf %85, %104 : vector<16x32xf32>
    %c0_36 = arith.constant 0 : index
    %c0_37 = arith.constant 0 : index
    %106 = vector.load %arg8[%c0_36, %c0_37] : memref<1x32xf32, #tpu.memory_space<vmem>>, vector<1x32xf32>
    %107 = vector.broadcast %106 : vector<1x32xf32> to vector<16x32xf32>
    %108 = arith.addf %105, %107 : vector<16x32xf32>
    %c0_38 = arith.constant 0 : index
    %c0_39 = arith.constant 0 : index
    %c0_40 = arith.constant 0 : index
    %109 = vector.load %arg9[%c0_38, %c0_39, %c0_40] : memref<1x16x32xf32, #tpu.memory_space<vmem>>, vector<1x16x32xf32>
    %110 = vector.shape_cast %109 : vector<1x16x32xf32> to vector<16x32xf32>
    %111 = vector.shape_cast %108 : vector<16x32xf32> to vector<1x16x32xf32>
    tpu.vector_store %arg9[%c0_38, %c0_39, %c0_40], %111 {strides = array<i32>} : memref<1x16x32xf32, #tpu.memory_space<vmem>>, vector<1x16x32xf32>,
    return
  }
  func.func @transform_0(%arg0: i32, %arg1: i32) -> (i32, i32, i32) {
    %c0_i32 = arith.constant 0 : i32
    %c0_i32_0 = arith.constant 0 : i32
    %c0_i32_1 = arith.constant 0 : i32
    return %arg0, %c0_i32, %c0_i32_0 : i32, i32, i32
  }
  func.func @transform_1(%arg0: i32, %arg1: i32) -> (i32, i32) {
    %c0_i32 = arith.constant 0 : i32
    %c0_i32_0 = arith.constant 0 : i32
    %c0_i32_1 = arith.constant 0 : i32
    return %c0_i32, %c0_i32_0 : i32, i32
  }
  func.func @transform_2(%arg0: i32, %arg1: i32) -> (i32, i32) {
    %c0_i32 = arith.constant 0 : i32
    %c0_i32_0 = arith.constant 0 : i32
    %c0_i32_1 = arith.constant 0 : i32
    return %c0_i32, %c0_i32_0 : i32, i32
  }
  func.func @transform_3(%arg0: i32, %arg1: i32) -> (i32, i32) {
    %c0_i32 = arith.constant 0 : i32
    %c0_i32_0 = arith.constant 0 : i32
    %c0_i32_1 = arith.constant 0 : i32
    return %c0_i32, %c0_i32_0 : i32, i32
  }
  func.func @transform_4(%arg0: i32, %arg1: i32) -> (i32, i32) {
    %c0_i32 = arith.constant 0 : i32
    %c0_i32_0 = arith.constant 0 : i32
    %c0_i32_1 = arith.constant 0 : i32
    return %c0_i32, %c0_i32_0 : i32, i32
  }
  func.func @transform_5(%arg0: i32, %arg1: i32) -> (i32, i32) {
    %c0_i32 = arith.constant 0 : i32
    %c0_i32_0 = arith.constant 0 : i32
    %c0_i32_1 = arith.constant 0 : i32
    return %c0_i32, %c0_i32_0 : i32, i32
  }
  func.func @transform_6(%arg0: i32, %arg1: i32) -> (i32, i32) {
    %c0_i32 = arith.constant 0 : i32
    %c0_i32_0 = arith.constant 0 : i32
    %c0_i32_1 = arith.constant 0 : i32
    return %c0_i32, %c0_i32_0 : i32, i32
  }
  func.func @transform_7(%arg0: i32, %arg1: i32) -> (i32, i32, i32) {
    %c0_i32 = arith.constant 0 : i32
    %c0_i32_0 = arith.constant 0 : i32
    return %arg0, %arg1, %c0_i32 : i32, i32, i32
  }
}

</mosaic_0001>

<llo_original>
// kernel: tpu_custom_call.1
$region0: #{tpu_custom_call.1}
  #allocation0 [shape = 'u32[]', space=smem, size = 0x4, offset = 0x4, fixed_abs, tag = 'smem constant byte address 0x4 - core index']
  #allocation1 [shape = 'u32[144,128]{1,0:T(1,128)}', space=vmem, size = 0x12000, scoped, tag = 'internal scratch']
  %s0 = inlined_call_operand.hbm [shape: f32[2,16,32], index: 0, kind: input, shape index: {}]
  %s1 = inlined_call_operand.hbm [shape: f32[32,32], index: 1, kind: input, shape index: {}]
  %s2 = inlined_call_operand.vmem [shape: f32[1,32], index: 2, kind: input, shape index: {}]
  %s3 = inlined_call_operand.hbm [shape: f32[32,64], index: 3, kind: input, shape index: {}]
  %s4 = inlined_call_operand.vmem [shape: f32[1,64], index: 4, kind: input, shape index: {}]
  %s5 = inlined_call_operand.hbm [shape: f32[32,32], index: 5, kind: input, shape index: {}]
  %s6 = inlined_call_operand.vmem [shape: f32[1,32], index: 6, kind: input, shape index: {}]
  %s7 = inlined_call_operand.hbm [shape: f32[2,16,32], index: 7, kind: output, shape index: {}]
  %s8 = sld [smem:[#allocation0]]
  $region77: #{tpu_custom_call.1} parent=0
    _
  %s10 = ssub.s32 1, %s8
  %s11 = scalar_select 0, %s10, %s8
  $region1: #{tpu_custom_call.1} parent=0
    #allocation2 [shape = 'u8[16384]{0}', space=vmem, size = 0x4000, scoped, tag = 'input window, operand 0']
    #allocation3 [shape = 's32[2]{0}', space=sflag, size = 0x8, scoped, tag = 'scoped memory for tpu_custom_call.1']
    #allocation4 [shape = 's32[2]{0}', space=sflag, size = 0x8, scoped, tag = 'scoped memory for tpu_custom_call.1']
    #allocation5 [shape = 'u8[16384]{0}', space=vmem, size = 0x4000, scoped, tag = 'input window, operand 1, single buffered']
    #allocation6 [shape = 's32[1]{0}', space=sflag, size = 0x4, scoped, tag = 'scoped memory for tpu_custom_call.1']
    #allocation7 [shape = 'u8[16384]{0}', space=vmem, size = 0x4000, scoped, tag = 'input window, operand 3, single buffered']
    #allocation8 [shape = 'u8[16384]{0}', space=vmem, size = 0x4000, scoped, tag = 'input window, operand 5, single buffered']
    #allocation9 [shape = 's32[1]{0}', space=sflag, size = 0x4, scoped, tag = 'scoped memory for tpu_custom_call.1']
    #allocation10 [shape = 'u8[16384]{0}', space=vmem, size = 0x4000, scoped, tag = 'output window, operand 0']
    %12 = vsyncpa [#allocation3], 0
    %s13 = scalar_lea.sflag [#allocation3], 1
    %14 = vsyncpa %s13, 0
    %15 = vsyncpa [#allocation6], 0
    %16 = vsyncpa [#allocation9], 0
    %17 = vsyncpa [#allocation4], 0
    %s18 = scalar_lea.sflag [#allocation4], 1
    %19 = vsyncpa %s18, 0
    loop: start=0, step=1, limit=4
    $region2: #{tpu_custom_call.1} parent=1 // loop_pre_header
      _
    $region3: #{tpu_custom_call.1} parent=1 // loop_header
      %s21 = sphi 0, %s25
      %p22 = scmp.ge.s32.totalorder %s21, 4
      %s28 = sphi 0, %s40
      %s29 = sphi 0, %s36
      %s30 = sphi 0, %s28
      %s31 = sphi 0, %s29
      %s32 = sphi 0, %s30
      %s33 = sphi 0, %s31
      %s43 = sphi 0, %s45
      %s46 = sphi 0, %s43
      %s47 = sphi 0, %s46
      %s63 = sphi 0, %s47
      %s67 = sphi 0, %s67
      %s69 = sphi 0, %s67
      %s70 = sphi 0, %s69
      %s84 = sphi 0, %s70
      %s88 = sphi 0, %s88
      %s90 = sphi 0, %s88
      %s91 = sphi 0, %s90
      %s105 = sphi 0, %s91
      %s109 = sphi 0, %s109
      %s111 = sphi 0, %s109
      %s112 = sphi 0, %s111
      %s126 = sphi 0, %s112
      %s130 = sphi 0, %s130
      %s132 = sphi 0, %s130
      %s133 = sphi 0, %s132
      %s147 = sphi 0, %s133
      %s151 = sphi 0, %s151
      %s153 = sphi 0, %s151
      %s154 = sphi 0, %s153
      %s168 = sphi 0, %s154
      %s172 = sphi 0, %s172
      %s174 = sphi 0, %s172
      %s175 = sphi 0, %s174
      %s189 = sphi 0, %s175
      %s197 = sphi 0, %s199
      %s200 = sphi 0, %s197
      %s201 = sphi 0, %s200
      %s217 = sphi 0, %s201
    $region4: #{tpu_custom_call.1} parent=1 // loop_header_branch
      %24 = sbr.rel (%p22) target = $region8
    $region5: #{tpu_custom_call.1} parent=1 // loop_body
      %s26 = ssub.s32 %s21, 1
      %s27 = ssub.s32 %s21, 2
      %s34 = sadd.s32 1, %s29
      %p35 = scmp.ge.s32.totalorder %s34, 1
      %s36 = scalar_select %p35, 0, %s34
      %s37 = sadd.s32 1, %s28
      %s38 = scalar_select %p35, %s37, %s28
      %p39 = scmp.ge.s32.totalorder %s38, 2
      %s40 = scalar_select %p39, 0, %s38
      %s41 = ssub.s32 %s28, %s40
      %p42 = scmp.eq.s32.totalorder %s41, 0
      %s44 = sadd.s32 %s43, 1
      %s45 = scalar_select %p42, %s43, %s44
      %p48 = pneg %p42
      %p49 = scmp.eq.s32.totalorder %s21, 1
      %p50 = por %p48, %p49
      %p51 = scmp.ne.s32.totalorder %s43, %s46
      %p52 = scmp.eq.s32.totalorder %s21, 0
      %p53 = por %p51, %p52
      %p54 = scmp.ne.s32.totalorder %s43, %s46
      %p55 = scmp.eq.s32.totalorder %s26, 1
      %p56 = por %p54, %p55
      %p57 = scmp.ne.s32.totalorder %s46, %s47
      %p58 = scmp.eq.s32.totalorder %s26, 0
      %p59 = por %p57, %p58
      %p60 = scmp.ne.s32.totalorder %s46, %s47
      %p61 = scmp.eq.s32.totalorder %s27, 1
      %p62 = por %p60, %p61
      %p64 = scmp.ne.s32.totalorder %s47, %s63
      %p65 = scmp.eq.s32.totalorder %s27, 0
      %p66 = por %p64, %p65
      %s68 = sadd.s32 %s67, 1
      %p71 = scmp.eq.s32.totalorder %s21, 1
      %p72 = scmp.ne.s32.totalorder %s67, %s69
      %p73 = scmp.eq.s32.totalorder %s21, 0
      %p74 = por %p72, %p73
      %p75 = scmp.ne.s32.totalorder %s67, %s69
      %p76 = scmp.eq.s32.totalorder %s26, 1
      %p77 = por %p75, %p76
      %p78 = scmp.ne.s32.totalorder %s69, %s70
      %p79 = scmp.eq.s32.totalorder %s26, 0
      %p80 = por %p78, %p79
      %p81 = scmp.ne.s32.totalorder %s69, %s70
      %p82 = scmp.eq.s32.totalorder %s27, 1
      %p83 = por %p81, %p82
      %p85 = scmp.ne.s32.totalorder %s70, %s84
      %p86 = scmp.eq.s32.totalorder %s27, 0
      %p87 = por %p85, %p86
      %s89 = sadd.s32 %s88, 1
      %p92 = scmp.eq.s32.totalorder %s21, 1
      %p93 = scmp.ne.s32.totalorder %s88, %s90
      %p94 = scmp.eq.s32.totalorder %s21, 0
      %p95 = por %p93, %p94
      %p96 = scmp.ne.s32.totalorder %s88, %s90
      %p97 = scmp.eq.s32.totalorder %s26, 1
      %p98 = por %p96, %p97
      %p99 = scmp.ne.s32.totalorder %s90, %s91
      %p100 = scmp.eq.s32.totalorder %s26, 0
      %p101 = por %p99, %p100
      %p102 = scmp.ne.s32.totalorder %s90, %s91
      %p103 = scmp.eq.s32.totalorder %s27, 1
      %p104 = por %p102, %p103
      %p106 = scmp.ne.s32.totalorder %s91, %s105
      %p107 = scmp.eq.s32.totalorder %s27, 0
      %p108 = por %p106, %p107
      %s110 = sadd.s32 %s109, 1
      %p113 = scmp.eq.s32.totalorder %s21, 1
      %p114 = scmp.ne.s32.totalorder %s109, %s111
      %p115 = scmp.eq.s32.totalorder %s21, 0
      %p116 = por %p114, %p115
      %p117 = scmp.ne.s32.totalorder %s109, %s111
      %p118 = scmp.eq.s32.totalorder %s26, 1
      %p119 = por %p117, %p118
      %p120 = scmp.ne.s32.totalorder %s111, %s112
      %p121 = scmp.eq.s32.totalorder %s26, 0
      %p122 = por %p120, %p121
      %p123 = scmp.ne.s32.totalorder %s111, %s112
      %p124 = scmp.eq.s32.totalorder %s27, 1
      %p125 = por %p123, %p124
      %p127 = scmp.ne.s32.totalorder %s112, %s126
      %p128 = scmp.eq.s32.totalorder %s27, 0
      %p129 = por %p127, %p128
      %s131 = sadd.s32 %s130, 1
      %p134 = scmp.eq.s32.totalorder %s21, 1
      %p135 = scmp.ne.s32.totalorder %s130, %s132
      %p136 = scmp.eq.s32.totalorder %s21, 0
      %p137 = por %p135, %p136
      %p138 = scmp.ne.s32.totalorder %s130, %s132
      %p139 = scmp.eq.s32.totalorder %s26, 1
      %p140 = por %p138, %p139
      %p141 = scmp.ne.s32.totalorder %s132, %s133
      %p142 = scmp.eq.s32.totalorder %s26, 0
      %p143 = por %p141, %p142
      %p144 = scmp.ne.s32.totalorder %s132, %s133
      %p145 = scmp.eq.s32.totalorder %s27, 1
      %p146 = por %p144, %p145
      %p148 = scmp.ne.s32.totalorder %s133, %s147
      %p149 = scmp.eq.s32.totalorder %s27, 0
      %p150 = por %p148, %p149
      %s152 = sadd.s32 %s151, 1
      %p155 = scmp.eq.s32.totalorder %s21, 1
      %p156 = scmp.ne.s32.totalorder %s151, %s153
      %p157 = scmp.eq.s32.totalorder %s21, 0
      %p158 = por %p156, %p157
      %p159 = scmp.ne.s32.totalorder %s151, %s153
      %p160 = scmp.eq.s32.totalorder %s26, 1
      %p161 = por %p159, %p160
      %p162 = scmp.ne.s32.totalorder %s153, %s154
      %p163 = scmp.eq.s32.totalorder %s26, 0
      %p164 = por %p162, %p163
      %p165 = scmp.ne.s32.totalorder %s153, %s154
      %p166 = scmp.eq.s32.totalorder %s27, 1
      %p167 = por %p165, %p166
      %p169 = scmp.ne.s32.totalorder %s154, %s168
      %p170 = scmp.eq.s32.totalorder %s27, 0
      %p171 = por %p169, %p170
      %s173 = sadd.s32 %s172, 1
      %p176 = scmp.eq.s32.totalorder %s21, 1
      %p177 = scmp.ne.s32.totalorder %s172, %s174
      %p178 = scmp.eq.s32.totalorder %s21, 0
      %p179 = por %p177, %p178
      %p180 = scmp.ne.s32.totalorder %s172, %s174
      %p181 = scmp.eq.s32.totalorder %s26, 1
      %p182 = por %p180, %p181
      %p183 = scmp.ne.s32.totalorder %s174, %s175
      %p184 = scmp.eq.s32.totalorder %s26, 0
      %p185 = por %p183, %p184
      %p186 = scmp.ne.s32.totalorder %s174, %s175
      %p187 = scmp.eq.s32.totalorder %s27, 1
      %p188 = por %p186, %p187
      %p190 = scmp.ne.s32.totalorder %s175, %s189
      %p191 = scmp.eq.s32.totalorder %s27, 0
      %p192 = por %p190, %p191
      %s193 = ssub.s32 %s28, %s40
      %s194 = ssub.s32 %s29, %s36
      %s195 = sor.u32 %s193, %s194
      %p196 = scmp.eq.s32.totalorder %s195, 0
      %s198 = sadd.s32 %s197, 1
      %s199 = scalar_select %p196, %s197, %s198
      %p202 = pneg %p196
      %p203 = scmp.eq.s32.totalorder %s21, 1
      %p204 = por %p202, %p203
      %p205 = scmp.ne.s32.totalorder %s197, %s200
      %p206 = scmp.eq.s32.totalorder %s21, 0
      %p207 = por %p205, %p206
      %p208 = scmp.ne.s32.totalorder %s197, %s200
      %p209 = scmp.eq.s32.totalorder %s26, 1
      %p210 = por %p208, %p209
      %p211 = scmp.ne.s32.totalorder %s200, %s201
      %p212 = scmp.eq.s32.totalorder %s26, 0
      %p213 = por %p211, %p212
      %p214 = scmp.ne.s32.totalorder %s200, %s201
      %p215 = scmp.eq.s32.totalorder %s27, 1
      %p216 = por %p214, %p215
      %p218 = scmp.ne.s32.totalorder %s201, %s217
      %p219 = scmp.eq.s32.totalorder %s27, 0
      %p220 = por %p218, %p219
      %p221 = scmp.le.s32.totalorder 1, %s21
      %p222 = scmp.lt.s32.totalorder %s21, 3
      %p223 = pnand %p221, %p222
      %p224 = pneg %p223
      // Predicated region
      $region9: #{tpu_custom_call.1} parent=5 // pred_check
        _
      $region10: #{tpu_custom_call.1} parent=5 // pred_check_branch
        %226 = sbr.rel (%p223) target = $region12
      $region11: #{tpu_custom_call.1} parent=5 // pred_region
        %s227 = ssub.s32 %s21, 1
        // Predicated region
        $region13: #{tpu_custom_call.1} parent=11 // pred_check
          %p228 = pneg %p80
        $region14: #{tpu_custom_call.1} parent=11 // pred_check_branch
          %230 = sbr.rel (%p228) target = $region16
        $region15: #{tpu_custom_call.1} parent=11 // pred_region
          %s232 = ssub.s32 512, 512
          %233 = vsyncadd [#allocation6], %s232
          %s234 = sshll.u32 [#allocation5], 4
          %s235 = int_to_ptr.vmem [resolvable:$true] %s234
          %240 = dma.hbm_to_vmem [thread:$0]  %s1, 512, %s235, [#allocation6], 128, 128, 8
        $region16: #{tpu_custom_call.1} parent=11 // pred_fallthru
          _
        // Predicated region
        $region17: #{tpu_custom_call.1} parent=11 // pred_check
          %p241 = pneg %p101
        $region18: #{tpu_custom_call.1} parent=11 // pred_check_branch
          %243 = sbr.rel (%p241) target = $region20
        $region19: #{tpu_custom_call.1} parent=11 // pred_region
          _
        $region20: #{tpu_custom_call.1} parent=11 // pred_fallthru
          _
        // Predicated region
        $region21: #{tpu_custom_call.1} parent=11 // pred_check
          %p244 = pneg %p122
        $region22: #{tpu_custom_call.1} parent=11 // pred_check_branch
          %246 = sbr.rel (%p244) target = $region24
        $region23: #{tpu_custom_call.1} parent=11 // pred_region
          %s248 = ssub.s32 512, 512
          %249 = vsyncadd [#allocation6], %s248
          %s250 = sshll.u32 [#allocation7], 4
          %s251 = int_to_ptr.vmem [resolvable:$true] %s250
          %256 = dma.hbm_to_vmem [thread:$0]  %s3, 512, %s251, [#allocation6], 128, 128, 8
        $region24: #{tpu_custom_call.1} parent=11 // pred_fallthru
          _
        // Predicated region
        $region25: #{tpu_custom_call.1} parent=11 // pred_check
          %p257 = pneg %p143
        $region26: #{tpu_custom_call.1} parent=11 // pred_check_branch
          %259 = sbr.rel (%p257) target = $region28
        $region27: #{tpu_custom_call.1} parent=11 // pred_region
          _
        $region28: #{tpu_custom_call.1} parent=11 // pred_fallthru
          _
        // Predicated region
        $region29: #{tpu_custom_call.1} parent=11 // pred_check
          %p260 = pneg %p164
        $region30: #{tpu_custom_call.1} parent=11 // pred_check_branch
          %262 = sbr.rel (%p260) target = $region32
        $region31: #{tpu_custom_call.1} parent=11 // pred_region
          %s264 = ssub.s32 512, 512
          %265 = vsyncadd [#allocation9], %s264
          %s266 = sshll.u32 [#allocation8], 4
          %s267 = int_to_ptr.vmem [resolvable:$true] %s266
          %272 = dma.hbm_to_vmem [thread:$0]  %s5, 512, %s267, [#allocation9], 128, 128, 8
        $region32: #{tpu_custom_call.1} parent=11 // pred_fallthru
          _
        // Predicated region
        $region33: #{tpu_custom_call.1} parent=11 // pred_check
          %p273 = pneg %p185
        $region34: #{tpu_custom_call.1} parent=11 // pred_check_branch
          %275 = sbr.rel (%p273) target = $region36
        $region35: #{tpu_custom_call.1} parent=11 // pred_region
          _
        $region36: #{tpu_custom_call.1} parent=11 // pred_fallthru
          _
      $region12: #{tpu_custom_call.1} parent=5 // pred_fallthru
        _
      %p276 = scmp.lt.s32.totalorder %s21, 2
      // Predicated region
      $region37: #{tpu_custom_call.1} parent=5 // pred_check
        %p277 = pneg %p276
      $region38: #{tpu_custom_call.1} parent=5 // pred_check_branch
        %279 = sbr.rel (%p277) target = $region40
      $region39: #{tpu_custom_call.1} parent=5 // pred_region
        // Predicated region
        $region41: #{tpu_custom_call.1} parent=39 // pred_check
          %p280 = pneg %p53
        $region42: #{tpu_custom_call.1} parent=39 // pred_check_branch
          %282 = sbr.rel (%p280) target = $region44
        $region43: #{tpu_custom_call.1} parent=39 // pred_region
          %s283 = sand.u32 %s43, 1
          %s284 = scalar_lea.sflag [#allocation3], %s283
          %s285 = sand.u32 %s43, 1
          %s286 = smul.addr %s285, 16
          %s287 = scalar_lea.vmem [#allocation2], %s286
          %s289 = ssub.s32 256, 256
          %290 = vsyncadd %s284, %s289
          %s291 = smul.addr %s28, 2
          %s292 = smul.addr %s291, 128
          %s293 = scalar_lea.hbm %s0, %s292
          %s294 = sshll.u32 %s287, 4
          %s295 = int_to_ptr.vmem [resolvable:$true] %s294
          %300 = dma.hbm_to_vmem [thread:$0]  %s293, 256, %s295, %s284, 128, 128, 8
        $region44: #{tpu_custom_call.1} parent=39 // pred_fallthru
          _
      $region40: #{tpu_custom_call.1} parent=5 // pred_fallthru
        _
      %p301 = scmp.le.s32.totalorder 1, %s21
      %p302 = scmp.lt.s32.totalorder %s21, 3
      %p303 = pnand %p301, %p302
      %p304 = pneg %p303
      // Predicated region
      $region45: #{tpu_custom_call.1} parent=5 // pred_check
        _
      $region46: #{tpu_custom_call.1} parent=5 // pred_check_branch
        %306 = sbr.rel (%p303) target = $region48
      $region47: #{tpu_custom_call.1} parent=5 // pred_region
        %s307 = ssub.s32 %s21, 1
        %s308 = sand.u32 %s46, 1
        %s309 = scalar_lea.sflag [#allocation3], %s308
        %s310 = sand.u32 %s46, 1
        %s311 = smul.addr %s310, 16
        %s312 = scalar_lea.vmem [#allocation2], %s311
        // Predicated region
        $region49: #{tpu_custom_call.1} parent=47 // pred_check
          %p313 = pneg %p59
        $region50: #{tpu_custom_call.1} parent=47 // pred_check_branch
          %315 = sbr.rel (%p313) target = $region52
        $region51: #{tpu_custom_call.1} parent=47 // pred_region
          %316 = dma.done %s309, 256
        $region52: #{tpu_custom_call.1} parent=47 // pred_fallthru
          _
        // Predicated region
        $region53: #{tpu_custom_call.1} parent=47 // pred_check
          %p317 = pneg %p80
        $region54: #{tpu_custom_call.1} parent=47 // pred_check_branch
          %319 = sbr.rel (%p317) target = $region56
        $region55: #{tpu_custom_call.1} parent=47 // pred_region
          %320 = dma.done [#allocation6], 512
        $region56: #{tpu_custom_call.1} parent=47 // pred_fallthru
          _
        // Predicated region
        $region57: #{tpu_custom_call.1} parent=47 // pred_check
          %p321 = pneg %p122
        $region58: #{tpu_custom_call.1} parent=47 // pred_check_branch
          %323 = sbr.rel (%p321) target = $region60
        $region59: #{tpu_custom_call.1} parent=47 // pred_region
          %324 = dma.done [#allocation6], 512
        $region60: #{tpu_custom_call.1} parent=47 // pred_fallthru
          _
        // Predicated region
        $region61: #{tpu_custom_call.1} parent=47 // pred_check
          %p325 = pneg %p164
        $region62: #{tpu_custom_call.1} parent=47 // pred_check_branch
          %327 = sbr.rel (%p325) target = $region64
        $region63: #{tpu_custom_call.1} parent=47 // pred_region
          %328 = dma.done [#allocation9], 512
        $region64: #{tpu_custom_call.1} parent=47 // pred_fallthru
          _
        %s329 = sand.u32 %s46, 1
        %s330 = scalar_lea.sflag [#allocation3], %s329
        %s331 = sand.u32 %s46, 1
        %s332 = smul.addr %s331, 16
        %s333 = scalar_lea.vmem [#allocation2], %s332
        %p334 = pneg %p59
        %p335 = pneg %p56
        %p336 = pneg %p80
        %p337 = pneg %p77
        %p338 = pneg %p101
        %p339 = pneg %p98
        %p340 = pneg %p122
        %p341 = pneg %p119
        %p342 = pneg %p143
        %p343 = pneg %p140
        %p344 = pneg %p164
        %p345 = pneg %p161
        %p346 = pneg %p185
        %p347 = pneg %p182
        %p348 = pneg %p213
        %p349 = pneg %p210
        %s350 = sand.u32 %s200, 1
        %s351 = scalar_lea.sflag [#allocation4], %s350
        %s352 = sand.u32 %s200, 1
        %s353 = smul.addr %s352, 16
        %s354 = scalar_lea.vmem [#allocation10], %s353
        %s355 = smul.u32 2, %s31
        %v357 = vld [vmem:[%s312] sm:$0xff]
        %v358 = vld [vmem:[%s312 + $0x8] sm:$0xff]
        %v359 = vpack.c.bf16 %v358, %v357
        %s360 = smul.u32 %s31, 16
        %s361 = scalar_lea.vmem %s312, %s360 [#allocation2]
        %v362 = vld [vmem:[%s361] sm:$0xff]
        %v363 = vld [vmem:[%s361 + $0x8] sm:$0xff]
        %v364 = vpack.c.bf16 %v363, %v362
        %v365 = vld [vmem:[#allocation5] sm:$0xff]
        %v366 = vld [vmem:[#allocation5 + $0x8] sm:$0xff]
        %v367 = vld [vmem:[#allocation5 + $0x10] sm:$0xff]
        %v368 = vld [vmem:[#allocation5 + $0x18] sm:$0xff]
        %v369 = vpack.c.bf16 %v366, %v365
        %v370 = vpack.c.bf16 %v368, %v367
        %v371 = vld [vmem:[#allocation7] sm:$0xff]
        %v372 = vld [vmem:[#allocation7 + $0x8] sm:$0xff]
        %v373 = vld [vmem:[#allocation7 + $0x10] sm:$0xff]
        %v374 = vld [vmem:[#allocation7 + $0x18] sm:$0xff]
        %v375 = vpack.c.bf16 %v372, %v371
        %v376 = vpack.c.bf16 %v374, %v373
        %v377 = vld [vmem:[#allocation8] sm:$0xff]
        %v378 = vld [vmem:[#allocation8 + $0x8] sm:$0xff]
        %v379 = vld [vmem:[#allocation8 + $0x10] sm:$0xff]
        %v380 = vld [vmem:[#allocation8 + $0x18] sm:$0xff]
        %v381 = vpack.c.bf16 %v378, %v377
        %v382 = vpack.c.bf16 %v380, %v379
        %v383 = vld [vmem:[%s2] sm:$0x1]
        %v385 = vlaneseq
        %v386 = vshrl.u32 %v385, 7
        %v387 = vsub.s32 0, %v386
        %v388 = vrot.slane %v383, %v387
        %vm390 = vcmask 261120
        %v392 = vsel %vm390, %v364, 0
        %394 = vmatprep.subr.bf16.mxu0 0
        %395 = vmatpush1.bf16.msra.mxu0 %v369
        %396 = vmatprep.subr.bf16.mxu0 0
        %397 = vmatpush1.bf16.msra.mxu0 %v370
        %398 = vmatprep.subr.bf16.mxu0 0
        %399 = vmatpush1.bf16.msra.mxu0 0
        %400 = vmatprep.subr.bf16.mxu0 0
        %401 = vmatpush1.bf16.msra.mxu0 0
        %402 = vmatprep.subr.bf16.mxu0 0
        %403 = vmatpush1.bf16.msra.mxu0 0
        %404 = vmatprep.subr.bf16.mxu0 0
        %405 = vmatpush1.bf16.msra.mxu0 0
        %406 = vmatprep.subr.bf16.mxu0 0
        %407 = vmatpush1.bf16.msra.mxu0 0
        %408 = vmatprep.subr.bf16.mxu0 0
        %409 = vmatpush1.bf16.msra.mxu0 0
        %410 = vmatprep.subr.bf16.mxu0 0
        %411 = vmatpush1.bf16.msra.mxu0 0
        %412 = vmatprep.subr.bf16.mxu0 0
        %413 = vmatpush1.bf16.msra.mxu0 0
        %414 = vmatprep.subr.bf16.mxu0 0
        %415 = vmatpush1.bf16.msra.mxu0 0
        %416 = vmatprep.subr.bf16.mxu0 0
        %417 = vmatpush1.bf16.msra.mxu0 0
        %418 = vmatprep.subr.bf16.mxu0 0
        %419 = vmatpush1.bf16.msra.mxu0 0
        %420 = vmatprep.subr.bf16.mxu0 0
        %421 = vmatpush1.bf16.msra.mxu0 0
        %422 = vmatprep.subr.bf16.mxu0 0
        %423 = vmatpush1.bf16.msra.mxu0 0
        %424 = vmatprep.subr.bf16.mxu0 0
        %425 = vmatpush1.bf16.msra.mxu0 0
        %426 = vmatprep.mubr.bf16.mxu0 0
        %427 = vmatmul.mubr.bf16.gmra.mrb[0].mxu0 %v392
        %v428 = vpop.f32.mrb[0].mxu0
        %v429 = vadd.f32 %v388, %v428
        %v430 = vpop.f32.mrb[0].mxu0
        %v431 = vpop.f32.mrb[0].mxu0
        %v432 = vadd.f32 %v388, %v431
        %v433 = vpop.f32.mrb[0].mxu0
        %434 = vdwg.mxu0
        %v435 = vpack.c.bf16 %v432, %v429
        %v436 = vld [vmem:[%s4] sm:$0x1]
        %v438 = vlaneseq
        %v439 = vshrl.u32 %v438, 7
        %v440 = vsub.s32 0, %v439
        %v441 = vrot.slane %v436, %v440
        %v444 = vsel %vm390, %v359, 0
        %446 = vmatprep.subr.bf16.mxu0 0
        %447 = vmatpush1.bf16.msra.mxu0 %v375
        %448 = vmatprep.subr.bf16.mxu0 0
        %449 = vmatpush1.bf16.msra.mxu0 %v376
        %450 = vmatprep.subr.bf16.mxu0 0
        %451 = vmatpush1.bf16.msra.mxu0 0
        %452 = vmatprep.subr.bf16.mxu0 0
        %453 = vmatpush1.bf16.msra.mxu0 0
        %454 = vmatprep.subr.bf16.mxu0 0
        %455 = vmatpush1.bf16.msra.mxu0 0
        %456 = vmatprep.subr.bf16.mxu0 0
        %457 = vmatpush1.bf16.msra.mxu0 0
        %458 = vmatprep.subr.bf16.mxu0 0
        %459 = vmatpush1.bf16.msra.mxu0 0
        %460 = vmatprep.subr.bf16.mxu0 0
        %461 = vmatpush1.bf16.msra.mxu0 0
        %462 = vmatprep.subr.bf16.mxu0 0
        %463 = vmatpush1.bf16.msra.mxu0 0
        %464 = vmatprep.subr.bf16.mxu0 0
        %465 = vmatpush1.bf16.msra.mxu0 0
        %466 = vmatprep.subr.bf16.mxu0 0
        %467 = vmatpush1.bf16.msra.mxu0 0
        %468 = vmatprep.subr.bf16.mxu0 0
        %469 = vmatpush1.bf16.msra.mxu0 0
        %470 = vmatprep.subr.bf16.mxu0 0
        %471 = vmatpush1.bf16.msra.mxu0 0
        %472 = vmatprep.subr.bf16.mxu0 0
        %473 = vmatpush1.bf16.msra.mxu0 0
        %474 = vmatprep.subr.bf16.mxu0 0
        %475 = vmatpush1.bf16.msra.mxu0 0
        %476 = vmatprep.subr.bf16.mxu0 0
        %477 = vmatpush1.bf16.msra.mxu0 0
        %478 = vmatprep.mubr.bf16.mxu0 0
        %479 = vmatmul.mubr.bf16.gmra.mrb[0].mxu0 %v444
        %v480 = vpop.f32.mrb[0].mxu0
        %v481 = vadd.f32 %v441, %v480
        %v482 = vpop.f32.mrb[0].mxu0
        %v483 = vpop.f32.mrb[0].mxu0
        %v484 = vadd.f32 %v441, %v483
        %v485 = vpop.f32.mrb[0].mxu0
        %486 = vdwg.mxu0
        %v487 = vpack.c.bf16 %v484, %v481
        %vm488 = vcmask 64512
        %v490 = vsel %vm488, %v435, 0
        %v493 = vsel %vm488, %v487, 0
        %495 = vmatprep.subr.bf16.mxu0 0
        %496 = vmatpush1.bf16.xpose.msra.mxu0 %v493
        %497 = vmatprep.subr.bf16.mxu0 0
        %498 = vmatpush1.bf16.xpose.msra.mxu0 0
        %499 = vmatprep.subr.bf16.mxu0 0
        %500 = vmatpush1.bf16.xpose.msra.mxu0 0
        %501 = vmatprep.subr.bf16.mxu0 0
        %502 = vmatpush1.bf16.xpose.msra.mxu0 0
        %503 = vmatprep.subr.bf16.mxu0 0
        %504 = vmatpush1.bf16.xpose.msra.mxu0 0
        %505 = vmatprep.subr.bf16.mxu0 0
        %506 = vmatpush1.bf16.xpose.msra.mxu0 0
        %507 = vmatprep.subr.bf16.mxu0 0
        %508 = vmatpush1.bf16.xpose.msra.mxu0 0
        %509 = vmatprep.subr.bf16.mxu0 0
        %510 = vmatpush1.bf16.xpose.msra.mxu0 0
        %511 = vmatprep.subr.bf16.mxu0 0
        %512 = vmatpush1.bf16.xpose.msra.mxu0 0
        %513 = vmatprep.subr.bf16.mxu0 0
        %514 = vmatpush1.bf16.xpose.msra.mxu0 0
        %515 = vmatprep.subr.bf16.mxu0 0
        %516 = vmatpush1.bf16.xpose.msra.mxu0 0
        %517 = vmatprep.subr.bf16.mxu0 0
        %518 = vmatpush1.bf16.xpose.msra.mxu0 0
        %519 = vmatprep.subr.bf16.mxu0 0
        %520 = vmatpush1.bf16.xpose.msra.mxu0 0
        %521 = vmatprep.subr.bf16.mxu0 0
        %522 = vmatpush1.bf16.xpose.msra.mxu0 0
        %523 = vmatprep.subr.bf16.mxu0 0
        %524 = vmatpush1.bf16.xpose.msra.mxu0 0
        %525 = vmatprep.subr.bf16.mxu0 0
        %526 = vmatpush1.bf16.xpose.msra.mxu0 0
        %527 = vmatprep.mubr.bf16.mxu0 0
        %528 = vmatmul.mubr.bf16.gmra.mrb[0].mxu0 %v490
        %v529 = vpop.f32.mrb[0].mxu0
        %v530 = vadd.f32 0.0, %v529
        %v531 = vpop.f32.mrb[0].mxu0
        %v532 = vpop.f32.mrb[0].mxu0
        %v533 = vadd.f32 0.0, %v532
        %v534 = vpop.f32.mrb[0].mxu0
        %535 = vdwg.mxu0
        %vm536 = vcmask 130048
        %v537 = vsel %vm536, %v530, -inf
        %538 = vmax.xlane.f32.xlu0 %v537
        %v539 = vpop.xlane.xlu0 %538
        %v540 = vsel %vm536, %v533, -inf
        %541 = vmax.xlane.f32.xlu0 %v540
        %v542 = vpop.xlane.xlu0 %541
        %v543 = vsub.f32 %v530, %v539
        %v544 = vsub.f32 %v533, %v542
        %v545 = vmul.f32 %v543, 1.442695
        %v546 = vpow.pop %v545
        %v547 = vmul.f32 %v544, 1.442695
        %v548 = vpow.pop %v547
        %v549 = vsel %vm536, %v546, 0.0
        %550 = vadd.xlane.f32.xlu0 %v549
        %v551 = vpop.xlane.xlu0 %550
        %v552 = vsel %vm536, %v548, 0.0
        %553 = vadd.xlane.f32.xlu0 %v552
        %v554 = vpop.xlane.xlu0 %553
        %v555 = vpack.c.bf16 %v548, %v546
        %557 = vrot.lane.b32.xlu0 %v487, 96
        %v558 = vpop.permute.xlu0 %557
        %v561 = vsel %vm536, %v555, 0
        %563 = vmatprep.subr.bf16.mxu0 0
        %564 = vmatpush1.bf16.msra.mxu0 %v558
        %565 = vmatprep.subr.bf16.mxu0 0
        %566 = vmatpush1.bf16.msra.mxu0 0
        %567 = vmatprep.subr.bf16.mxu0 0
        %568 = vmatpush1.bf16.msra.mxu0 0
        %569 = vmatprep.subr.bf16.mxu0 0
        %570 = vmatpush1.bf16.msra.mxu0 0
        %571 = vmatprep.subr.bf16.mxu0 0
        %572 = vmatpush1.bf16.msra.mxu0 0
        %573 = vmatprep.subr.bf16.mxu0 0
        %574 = vmatpush1.bf16.msra.mxu0 0
        %575 = vmatprep.subr.bf16.mxu0 0
        %576 = vmatpush1.bf16.msra.mxu0 0
        %577 = vmatprep.subr.bf16.mxu0 0
        %578 = vmatpush1.bf16.msra.mxu0 0
        %579 = vmatprep.subr.bf16.mxu0 0
        %580 = vmatpush1.bf16.msra.mxu0 0
        %581 = vmatprep.subr.bf16.mxu0 0
        %582 = vmatpush1.bf16.msra.mxu0 0
        %583 = vmatprep.subr.bf16.mxu0 0
        %584 = vmatpush1.bf16.msra.mxu0 0
        %585 = vmatprep.subr.bf16.mxu0 0
        %586 = vmatpush1.bf16.msra.mxu0 0
        %587 = vmatprep.subr.bf16.mxu0 0
        %588 = vmatpush1.bf16.msra.mxu0 0
        %589 = vmatprep.subr.bf16.mxu0 0
        %590 = vmatpush1.bf16.msra.mxu0 0
        %591 = vmatprep.subr.bf16.mxu0 0
        %592 = vmatpush1.bf16.msra.mxu0 0
        %593 = vmatprep.subr.bf16.mxu0 0
        %594 = vmatpush1.bf16.msra.mxu0 0
        %595 = vmatprep.mubr.bf16.mxu0 0
        %596 = vmatmul.mubr.bf16.gmra.mrb[0].mxu0 %v561
        %v597 = vpop.f32.mrb[0].mxu0
        %v598 = vadd.f32 0.0, %v597
        %v599 = vpop.f32.mrb[0].mxu0
        %v600 = vpop.f32.mrb[0].mxu0
        %v601 = vadd.f32 0.0, %v600
        %v602 = vpop.f32.mrb[0].mxu0
        %603 = vdwg.mxu0
        %v604 = vrcp.pop %v551
        %v605 = vrcp.pop %v554
        %v606 = vmul.f32 %v598, %v604
        %v607 = vmul.f32 %v601, %v605
        %v608 = vpack.c.bf16 %v607, %v606
        %610 = vrot.lane.b32.xlu0 %v435, 120
        %v611 = vpop.permute.xlu0 %610
        %612 = vrot.lane.b32.xlu0 %v487, 120
        %v613 = vpop.permute.xlu0 %612
        %v615 = vsel %vm488, %v611, 0
        %v618 = vsel %vm488, %v613, 0
        %620 = vmatprep.subr.bf16.mxu0 0
        %621 = vmatpush1.bf16.xpose.msra.mxu0 %v618
        %622 = vmatprep.subr.bf16.mxu0 0
        %623 = vmatpush1.bf16.xpose.msra.mxu0 0
        %624 = vmatprep.subr.bf16.mxu0 0
        %625 = vmatpush1.bf16.xpose.msra.mxu0 0
        %626 = vmatprep.subr.bf16.mxu0 0
        %627 = vmatpush1.bf16.xpose.msra.mxu0 0
        %628 = vmatprep.subr.bf16.mxu0 0
        %629 = vmatpush1.bf16.xpose.msra.mxu0 0
        %630 = vmatprep.subr.bf16.mxu0 0
        %631 = vmatpush1.bf16.xpose.msra.mxu0 0
        %632 = vmatprep.subr.bf16.mxu0 0
        %633 = vmatpush1.bf16.xpose.msra.mxu0 0
        %634 = vmatprep.subr.bf16.mxu0 0
        %635 = vmatpush1.bf16.xpose.msra.mxu0 0
        %636 = vmatprep.subr.bf16.mxu0 0
        %637 = vmatpush1.bf16.xpose.msra.mxu0 0
        %638 = vmatprep.subr.bf16.mxu0 0
        %639 = vmatpush1.bf16.xpose.msra.mxu0 0
        %640 = vmatprep.subr.bf16.mxu0 0
        %641 = vmatpush1.bf16.xpose.msra.mxu0 0
        %642 = vmatprep.subr.bf16.mxu0 0
        %643 = vmatpush1.bf16.xpose.msra.mxu0 0
        %644 = vmatprep.subr.bf16.mxu0 0
        %645 = vmatpush1.bf16.xpose.msra.mxu0 0
        %646 = vmatprep.subr.bf16.mxu0 0
        %647 = vmatpush1.bf16.xpose.msra.mxu0 0
        %648 = vmatprep.subr.bf16.mxu0 0
        %649 = vmatpush1.bf16.xpose.msra.mxu0 0
        %650 = vmatprep.subr.bf16.mxu0 0
        %651 = vmatpush1.bf16.xpose.msra.mxu0 0
        %652 = vmatprep.mubr.bf16.mxu0 0
        %653 = vmatmul.mubr.bf16.gmra.mrb[0].mxu0 %v615
        %v654 = vpop.f32.mrb[0].mxu0
        %v655 = vadd.f32 0.0, %v654
        %v656 = vpop.f32.mrb[0].mxu0
        %v657 = vpop.f32.mrb[0].mxu0
        %v658 = vadd.f32 0.0, %v657
        %v659 = vpop.f32.mrb[0].mxu0
        %660 = vdwg.mxu0
        %v661 = vsel %vm536, %v655, -inf
        %662 = vmax.xlane.f32.xlu0 %v661
        %v663 = vpop.xlane.xlu0 %662
        %v664 = vsel %vm536, %v658, -inf
        %665 = vmax.xlane.f32.xlu0 %v664
        %v666 = vpop.xlane.xlu0 %665
        %v667 = vsub.f32 %v655, %v663
        %v668 = vsub.f32 %v658, %v666
        %v669 = vmul.f32 %v667, 1.442695
        %v670 = vpow.pop %v669
        %v671 = vmul.f32 %v668, 1.442695
        %v672 = vpow.pop %v671
        %v673 = vsel %vm536, %v670, 0.0
        %674 = vadd.xlane.f32.xlu0 %v673
        %v675 = vpop.xlane.xlu0 %674
        %v676 = vsel %vm536, %v672, 0.0
        %677 = vadd.xlane.f32.xlu0 %v676
        %v678 = vpop.xlane.xlu0 %677
        %v679 = vpack.c.bf16 %v672, %v670
        %680 = vrot.lane.b32.xlu0 %v487, 88
        %v681 = vpop.permute.xlu0 %680
        %v684 = vsel %vm536, %v679, 0
        %686 = vmatprep.subr.bf16.mxu0 0
        %687 = vmatpush1.bf16.msra.mxu0 %v681
        %688 = vmatprep.subr.bf16.mxu0 0
        %689 = vmatpush1.bf16.msra.mxu0 0
        %690 = vmatprep.subr.bf16.mxu0 0
        %691 = vmatpush1.bf16.msra.mxu0 0
        %692 = vmatprep.subr.bf16.mxu0 0
        %693 = vmatpush1.bf16.msra.mxu0 0
        %694 = vmatprep.subr.bf16.mxu0 0
        %695 = vmatpush1.bf16.msra.mxu0 0
        %696 = vmatprep.subr.bf16.mxu0 0
        %697 = vmatpush1.bf16.msra.mxu0 0
        %698 = vmatprep.subr.bf16.mxu0 0
        %699 = vmatpush1.bf16.msra.mxu0 0
        %700 = vmatprep.subr.bf16.mxu0 0
        %701 = vmatpush1.bf16.msra.mxu0 0
        %702 = vmatprep.subr.bf16.mxu0 0
        %703 = vmatpush1.bf16.msra.mxu0 0
        %704 = vmatprep.subr.bf16.mxu0 0
        %705 = vmatpush1.bf16.msra.mxu0 0
        %706 = vmatprep.subr.bf16.mxu0 0
        %707 = vmatpush1.bf16.msra.mxu0 0
        %708 = vmatprep.subr.bf16.mxu0 0
        %709 = vmatpush1.bf16.msra.mxu0 0
        %710 = vmatprep.subr.bf16.mxu0 0
        %711 = vmatpush1.bf16.msra.mxu0 0
        %712 = vmatprep.subr.bf16.mxu0 0
        %713 = vmatpush1.bf16.msra.mxu0 0
        %714 = vmatprep.subr.bf16.mxu0 0
        %715 = vmatpush1.bf16.msra.mxu0 0
        %716 = vmatprep.subr.bf16.mxu0 0
        %717 = vmatpush1.bf16.msra.mxu0 0
        %718 = vmatprep.mubr.bf16.mxu0 0
        %719 = vmatmul.mubr.bf16.gmra.mrb[0].mxu0 %v684
        %v720 = vpop.f32.mrb[0].mxu0
        %v721 = vadd.f32 0.0, %v720
        %v722 = vpop.f32.mrb[0].mxu0
        %v723 = vpop.f32.mrb[0].mxu0
        %v724 = vadd.f32 0.0, %v723
        %v725 = vpop.f32.mrb[0].mxu0
        %726 = vdwg.mxu0
        %v727 = vrcp.pop %v675
        %v728 = vrcp.pop %v678
        %v729 = vmul.f32 %v721, %v727
        %v730 = vmul.f32 %v724, %v728
        %v731 = vpack.c.bf16 %v730, %v729
        %v733 = vrot.slane %v381, 4
        %v735 = vsel %vm488, %v731, 0
        %vm737 = vcmask 1043456
        %v739 = vsel %vm737, %v733, 0
        %741 = vmatprep.subr.bf16.mxu0 0
        %742 = vmatpush1.bf16.msra.mxu0 %v739
        %743 = vmatprep.subr.bf16.mxu0 0
        %744 = vmatpush1.bf16.msra.mxu0 0
        %745 = vmatprep.subr.bf16.mxu0 0
        %746 = vmatpush1.bf16.msra.mxu0 0
        %747 = vmatprep.subr.bf16.mxu0 0
        %748 = vmatpush1.bf16.msra.mxu0 0
        %749 = vmatprep.subr.bf16.mxu0 0
        %750 = vmatpush1.bf16.msra.mxu0 0
        %751 = vmatprep.subr.bf16.mxu0 0
        %752 = vmatpush1.bf16.msra.mxu0 0
        %753 = vmatprep.subr.bf16.mxu0 0
        %754 = vmatpush1.bf16.msra.mxu0 0
        %755 = vmatprep.subr.bf16.mxu0 0
        %756 = vmatpush1.bf16.msra.mxu0 0
        %757 = vmatprep.subr.bf16.mxu0 0
        %758 = vmatpush1.bf16.msra.mxu0 0
        %759 = vmatprep.subr.bf16.mxu0 0
        %760 = vmatpush1.bf16.msra.mxu0 0
        %761 = vmatprep.subr.bf16.mxu0 0
        %762 = vmatpush1.bf16.msra.mxu0 0
        %763 = vmatprep.subr.bf16.mxu0 0
        %764 = vmatpush1.bf16.msra.mxu0 0
        %765 = vmatprep.subr.bf16.mxu0 0
        %766 = vmatpush1.bf16.msra.mxu0 0
        %767 = vmatprep.subr.bf16.mxu0 0
        %768 = vmatpush1.bf16.msra.mxu0 0
        %769 = vmatprep.subr.bf16.mxu0 0
        %770 = vmatpush1.bf16.msra.mxu0 0
        %771 = vmatprep.subr.bf16.mxu0 0
        %772 = vmatpush1.bf16.msra.mxu0 0
        %773 = vmatprep.mubr.bf16.mxu0 0
        %774 = vmatmul.mubr.bf16.gmra.mrb[0].mxu0 %v735
        %v775 = vpop.f32.mrb[0].mxu0
        %v776 = vadd.f32 0.0, %v775
        %v777 = vpop.f32.mrb[0].mxu0
        %v778 = vpop.f32.mrb[0].mxu0
        %v779 = vadd.f32 0.0, %v778
        %v780 = vpop.f32.mrb[0].mxu0
        %781 = vdwg.mxu0
        %v783 = vsel %vm488, %v608, 0
        %v786 = vsel %vm737, %v381, 0
        %788 = vmatprep.subr.bf16.mxu0 0
        %789 = vmatpush1.bf16.msra.mxu0 %v786
        %790 = vmatprep.subr.bf16.mxu0 0
        %791 = vmatpush1.bf16.msra.mxu0 0
        %792 = vmatprep.subr.bf16.mxu0 0
        %793 = vmatpush1.bf16.msra.mxu0 0
        %794 = vmatprep.subr.bf16.mxu0 0
        %795 = vmatpush1.bf16.msra.mxu0 0
        %796 = vmatprep.subr.bf16.mxu0 0
        %797 = vmatpush1.bf16.msra.mxu0 0
        %798 = vmatprep.subr.bf16.mxu0 0
        %799 = vmatpush1.bf16.msra.mxu0 0
        %800 = vmatprep.subr.bf16.mxu0 0
        %801 = vmatpush1.bf16.msra.mxu0 0
        %802 = vmatprep.subr.bf16.mxu0 0
        %803 = vmatpush1.bf16.msra.mxu0 0
        %804 = vmatprep.subr.bf16.mxu0 0
        %805 = vmatpush1.bf16.msra.mxu0 0
        %806 = vmatprep.subr.bf16.mxu0 0
        %807 = vmatpush1.bf16.msra.mxu0 0
        %808 = vmatprep.subr.bf16.mxu0 0
        %809 = vmatpush1.bf16.msra.mxu0 0
        %810 = vmatprep.subr.bf16.mxu0 0
        %811 = vmatpush1.bf16.msra.mxu0 0
        %812 = vmatprep.subr.bf16.mxu0 0
        %813 = vmatpush1.bf16.msra.mxu0 0
        %814 = vmatprep.subr.bf16.mxu0 0
        %815 = vmatpush1.bf16.msra.mxu0 0
        %816 = vmatprep.subr.bf16.mxu0 0
        %817 = vmatpush1.bf16.msra.mxu0 0
        %818 = vmatprep.subr.bf16.mxu0 0
        %819 = vmatpush1.bf16.msra.mxu0 0
        %820 = vmatprep.mubr.bf16.mxu0 0
        %821 = vmatmul.mubr.bf16.gmra.mrb[0].mxu0 %v783
        %v822 = vpop.f32.mrb[0].mxu0
        %v823 = vadd.f32 %v776, %v822
        %v824 = vpop.f32.mrb[0].mxu0
        %v825 = vpop.f32.mrb[0].mxu0
        %v826 = vadd.f32 %v779, %v825
        %v827 = vpop.f32.mrb[0].mxu0
        %828 = vdwg.mxu0
        %829 = vrot.lane.b32.xlu0 %v435, 112
        %v830 = vpop.permute.xlu0 %829
        %831 = vrot.lane.b32.xlu0 %v487, 112
        %v832 = vpop.permute.xlu0 %831
        %v834 = vsel %vm488, %v830, 0
        %v837 = vsel %vm488, %v832, 0
        %839 = vmatprep.subr.bf16.mxu0 0
        %840 = vmatpush1.bf16.xpose.msra.mxu0 %v837
        %841 = vmatprep.subr.bf16.mxu0 0
        %842 = vmatpush1.bf16.xpose.msra.mxu0 0
        %843 = vmatprep.subr.bf16.mxu0 0
        %844 = vmatpush1.bf16.xpose.msra.mxu0 0
        %845 = vmatprep.subr.bf16.mxu0 0
        %846 = vmatpush1.bf16.xpose.msra.mxu0 0
        %847 = vmatprep.subr.bf16.mxu0 0
        %848 = vmatpush1.bf16.xpose.msra.mxu0 0
        %849 = vmatprep.subr.bf16.mxu0 0
        %850 = vmatpush1.bf16.xpose.msra.mxu0 0
        %851 = vmatprep.subr.bf16.mxu0 0
        %852 = vmatpush1.bf16.xpose.msra.mxu0 0
        %853 = vmatprep.subr.bf16.mxu0 0
        %854 = vmatpush1.bf16.xpose.msra.mxu0 0
        %855 = vmatprep.subr.bf16.mxu0 0
        %856 = vmatpush1.bf16.xpose.msra.mxu0 0
        %857 = vmatprep.subr.bf16.mxu0 0
        %858 = vmatpush1.bf16.xpose.msra.mxu0 0
        %859 = vmatprep.subr.bf16.mxu0 0
        %860 = vmatpush1.bf16.xpose.msra.mxu0 0
        %861 = vmatprep.subr.bf16.mxu0 0
        %862 = vmatpush1.bf16.xpose.msra.mxu0 0
        %863 = vmatprep.subr.bf16.mxu0 0
        %864 = vmatpush1.bf16.xpose.msra.mxu0 0
        %865 = vmatprep.subr.bf16.mxu0 0
        %866 = vmatpush1.bf16.xpose.msra.mxu0 0
        %867 = vmatprep.subr.bf16.mxu0 0
        %868 = vmatpush1.bf16.xpose.msra.mxu0 0
        %869 = vmatprep.subr.bf16.mxu0 0
        %870 = vmatpush1.bf16.xpose.msra.mxu0 0
        %871 = vmatprep.mubr.bf16.mxu0 0
        %872 = vmatmul.mubr.bf16.gmra.mrb[0].mxu0 %v834
        %v873 = vpop.f32.mrb[0].mxu0
        %v874 = vadd.f32 0.0, %v873
        %v875 = vpop.f32.mrb[0].mxu0
        %v876 = vpop.f32.mrb[0].mxu0
        %v877 = vadd.f32 0.0, %v876
        %v878 = vpop.f32.mrb[0].mxu0
        %879 = vdwg.mxu0
        %v880 = vsel %vm536, %v874, -inf
        %881 = vmax.xlane.f32.xlu0 %v880
        %v882 = vpop.xlane.xlu0 %881
        %v883 = vsel %vm536, %v877, -inf
        %884 = vmax.xlane.f32.xlu0 %v883
        %v885 = vpop.xlane.xlu0 %884
        %v886 = vsub.f32 %v874, %v882
        %v887 = vsub.f32 %v877, %v885
        %v888 = vmul.f32 %v886, 1.442695
        %v889 = vpow.pop %v888
        %v890 = vmul.f32 %v887, 1.442695
        %v891 = vpow.pop %v890
        %v892 = vsel %vm536, %v889, 0.0
        %893 = vadd.xlane.f32.xlu0 %v892
        %v894 = vpop.xlane.xlu0 %893
        %v895 = vsel %vm536, %v891, 0.0
        %896 = vadd.xlane.f32.xlu0 %v895
        %v897 = vpop.xlane.xlu0 %896
        %v898 = vpack.c.bf16 %v891, %v889
        %899 = vrot.lane.b32.xlu0 %v487, 80
        %v900 = vpop.permute.xlu0 %899
        %v903 = vsel %vm536, %v898, 0
        %905 = vmatprep.subr.bf16.mxu0 0
        %906 = vmatpush1.bf16.msra.mxu0 %v900
        %907 = vmatprep.subr.bf16.mxu0 0
        %908 = vmatpush1.bf16.msra.mxu0 0
        %909 = vmatprep.subr.bf16.mxu0 0
        %910 = vmatpush1.bf16.msra.mxu0 0
        %911 = vmatprep.subr.bf16.mxu0 0
        %912 = vmatpush1.bf16.msra.mxu0 0
        %913 = vmatprep.subr.bf16.mxu0 0
        %914 = vmatpush1.bf16.msra.mxu0 0
        %915 = vmatprep.subr.bf16.mxu0 0
        %916 = vmatpush1.bf16.msra.mxu0 0
        %917 = vmatprep.subr.bf16.mxu0 0
        %918 = vmatpush1.bf16.msra.mxu0 0
        %919 = vmatprep.subr.bf16.mxu0 0
        %920 = vmatpush1.bf16.msra.mxu0 0
        %921 = vmatprep.subr.bf16.mxu0 0
        %922 = vmatpush1.bf16.msra.mxu0 0
        %923 = vmatprep.subr.bf16.mxu0 0
        %924 = vmatpush1.bf16.msra.mxu0 0
        %925 = vmatprep.subr.bf16.mxu0 0
        %926 = vmatpush1.bf16.msra.mxu0 0
        %927 = vmatprep.subr.bf16.mxu0 0
        %928 = vmatpush1.bf16.msra.mxu0 0
        %929 = vmatprep.subr.bf16.mxu0 0
        %930 = vmatpush1.bf16.msra.mxu0 0
        %931 = vmatprep.subr.bf16.mxu0 0
        %932 = vmatpush1.bf16.msra.mxu0 0
        %933 = vmatprep.subr.bf16.mxu0 0
        %934 = vmatpush1.bf16.msra.mxu0 0
        %935 = vmatprep.subr.bf16.mxu0 0
        %936 = vmatpush1.bf16.msra.mxu0 0
        %937 = vmatprep.mubr.bf16.mxu0 0
        %938 = vmatmul.mubr.bf16.gmra.mrb[0].mxu0 %v903
        %v939 = vpop.f32.mrb[0].mxu0
        %v940 = vadd.f32 0.0, %v939
        %v941 = vpop.f32.mrb[0].mxu0
        %v942 = vpop.f32.mrb[0].mxu0
        %v943 = vadd.f32 0.0, %v942
        %v944 = vpop.f32.mrb[0].mxu0
        %945 = vdwg.mxu0
        %v946 = vrcp.pop %v894
        %v947 = vrcp.pop %v897
        %v948 = vmul.f32 %v940, %v946
        %v949 = vmul.f32 %v943, %v947
        %v950 = vpack.c.bf16 %v949, %v948
        %v952 = vsel %vm488, %v950, 0
        %v955 = vsel %vm737, %v382, 0
        %957 = vmatprep.subr.bf16.mxu0 0
        %958 = vmatpush1.bf16.msra.mxu0 %v955
        %959 = vmatprep.subr.bf16.mxu0 0
        %960 = vmatpush1.bf16.msra.mxu0 0
        %961 = vmatprep.subr.bf16.mxu0 0
        %962 = vmatpush1.bf16.msra.mxu0 0
        %963 = vmatprep.subr.bf16.mxu0 0
        %964 = vmatpush1.bf16.msra.mxu0 0
        %965 = vmatprep.subr.bf16.mxu0 0
        %966 = vmatpush1.bf16.msra.mxu0 0
        %967 = vmatprep.subr.bf16.mxu0 0
        %968 = vmatpush1.bf16.msra.mxu0 0
        %969 = vmatprep.subr.bf16.mxu0 0
        %970 = vmatpush1.bf16.msra.mxu0 0
        %971 = vmatprep.subr.bf16.mxu0 0
        %972 = vmatpush1.bf16.msra.mxu0 0
        %973 = vmatprep.subr.bf16.mxu0 0
        %974 = vmatpush1.bf16.msra.mxu0 0
        %975 = vmatprep.subr.bf16.mxu0 0
        %976 = vmatpush1.bf16.msra.mxu0 0
        %977 = vmatprep.subr.bf16.mxu0 0
        %978 = vmatpush1.bf16.msra.mxu0 0
        %979 = vmatprep.subr.bf16.mxu0 0
        %980 = vmatpush1.bf16.msra.mxu0 0
        %981 = vmatprep.subr.bf16.mxu0 0
        %982 = vmatpush1.bf16.msra.mxu0 0
        %983 = vmatprep.subr.bf16.mxu0 0
        %984 = vmatpush1.bf16.msra.mxu0 0
        %985 = vmatprep.subr.bf16.mxu0 0
        %986 = vmatpush1.bf16.msra.mxu0 0
        %987 = vmatprep.subr.bf16.mxu0 0
        %988 = vmatpush1.bf16.msra.mxu0 0
        %989 = vmatprep.mubr.bf16.mxu0 0
        %990 = vmatmul.mubr.bf16.gmra.mrb[0].mxu0 %v952
        %v991 = vpop.f32.mrb[0].mxu0
        %v992 = vadd.f32 0.0, %v991
        %v993 = vpop.f32.mrb[0].mxu0
        %v994 = vpop.f32.mrb[0].mxu0
        %v995 = vadd.f32 0.0, %v994
        %v996 = vpop.f32.mrb[0].mxu0
        %997 = vdwg.mxu0
        %v998 = vadd.f32 %v823, %v992
        %v999 = vadd.f32 %v826, %v995
        %1000 = vrot.lane.b32.xlu0 %v435, 104
        %v1001 = vpop.permute.xlu0 %1000
        %1002 = vrot.lane.b32.xlu0 %v487, 104
        %v1003 = vpop.permute.xlu0 %1002
        %v1005 = vsel %vm488, %v1001, 0
        %v1008 = vsel %vm488, %v1003, 0
        %1010 = vmatprep.subr.bf16.mxu0 0
        %1011 = vmatpush1.bf16.xpose.msra.mxu0 %v1008
        %1012 = vmatprep.subr.bf16.mxu0 0
        %1013 = vmatpush1.bf16.xpose.msra.mxu0 0
        %1014 = vmatprep.subr.bf16.mxu0 0
        %1015 = vmatpush1.bf16.xpose.msra.mxu0 0
        %1016 = vmatprep.subr.bf16.mxu0 0
        %1017 = vmatpush1.bf16.xpose.msra.mxu0 0
        %1018 = vmatprep.subr.bf16.mxu0 0
        %1019 = vmatpush1.bf16.xpose.msra.mxu0 0
        %1020 = vmatprep.subr.bf16.mxu0 0
        %1021 = vmatpush1.bf16.xpose.msra.mxu0 0
        %1022 = vmatprep.subr.bf16.mxu0 0
        %1023 = vmatpush1.bf16.xpose.msra.mxu0 0
        %1024 = vmatprep.subr.bf16.mxu0 0
        %1025 = vmatpush1.bf16.xpose.msra.mxu0 0
        %1026 = vmatprep.subr.bf16.mxu0 0
        %1027 = vmatpush1.bf16.xpose.msra.mxu0 0
        %1028 = vmatprep.subr.bf16.mxu0 0
        %1029 = vmatpush1.bf16.xpose.msra.mxu0 0
        %1030 = vmatprep.subr.bf16.mxu0 0
        %1031 = vmatpush1.bf16.xpose.msra.mxu0 0
        %1032 = vmatprep.subr.bf16.mxu0 0
        %1033 = vmatpush1.bf16.xpose.msra.mxu0 0
        %1034 = vmatprep.subr.bf16.mxu0 0
        %1035 = vmatpush1.bf16.xpose.msra.mxu0 0
        %1036 = vmatprep.subr.bf16.mxu0 0
        %1037 = vmatpush1.bf16.xpose.msra.mxu0 0
        %1038 = vmatprep.subr.bf16.mxu0 0
        %1039 = vmatpush1.bf16.xpose.msra.mxu0 0
        %1040 = vmatprep.subr.bf16.mxu0 0
        %1041 = vmatpush1.bf16.xpose.msra.mxu0 0
        %1042 = vmatprep.mubr.bf16.mxu0 0
        %1043 = vmatmul.mubr.bf16.gmra.mrb[0].mxu0 %v1005
        %v1044 = vpop.f32.mrb[0].mxu0
        %v1045 = vadd.f32 0.0, %v1044
        %v1046 = vpop.f32.mrb[0].mxu0
        %v1047 = vpop.f32.mrb[0].mxu0
        %v1048 = vadd.f32 0.0, %v1047
        %v1049 = vpop.f32.mrb[0].mxu0
        %1050 = vdwg.mxu0
        %v1051 = vsel %vm536, %v1045, -inf
        %1052 = vmax.xlane.f32.xlu0 %v1051
        %v1053 = vpop.xlane.xlu0 %1052
        %v1054 = vsel %vm536, %v1048, -inf
        %1055 = vmax.xlane.f32.xlu0 %v1054
        %v1056 = vpop.xlane.xlu0 %1055
        %v1057 = vsub.f32 %v1045, %v1053
        %v1058 = vsub.f32 %v1048, %v1056
        %v1059 = vmul.f32 %v1057, 1.442695
        %v1060 = vpow.pop %v1059
        %v1061 = vmul.f32 %v1058, 1.442695
        %v1062 = vpow.pop %v1061
        %v1063 = vsel %vm536, %v1060, 0.0
        %1064 = vadd.xlane.f32.xlu0 %v1063
        %v1065 = vpop.xlane.xlu0 %1064
        %v1066 = vsel %vm536, %v1062, 0.0
        %1067 = vadd.xlane.f32.xlu0 %v1066
        %v1068 = vpop.xlane.xlu0 %1067
        %v1069 = vpack.c.bf16 %v1062, %v1060
        %1070 = vrot.lane.b32.xlu0 %v487, 72
        %v1071 = vpop.permute.xlu0 %1070
        %v1074 = vsel %vm536, %v1069, 0
        %1076 = vmatprep.subr.bf16.mxu0 0
        %1077 = vmatpush1.bf16.msra.mxu0 %v1071
        %1078 = vmatprep.subr.bf16.mxu0 0
        %1079 = vmatpush1.bf16.msra.mxu0 0
        %1080 = vmatprep.subr.bf16.mxu0 0
        %1081 = vmatpush1.bf16.msra.mxu0 0
        %1082 = vmatprep.subr.bf16.mxu0 0
        %1083 = vmatpush1.bf16.msra.mxu0 0
        %1084 = vmatprep.subr.bf16.mxu0 0
        %1085 = vmatpush1.bf16.msra.mxu0 0
        %1086 = vmatprep.subr.bf16.mxu0 0
        %1087 = vmatpush1.bf16.msra.mxu0 0
        %1088 = vmatprep.subr.bf16.mxu0 0
        %1089 = vmatpush1.bf16.msra.mxu0 0
        %1090 = vmatprep.subr.bf16.mxu0 0
        %1091 = vmatpush1.bf16.msra.mxu0 0
        %1092 = vmatprep.subr.bf16.mxu0 0
        %1093 = vmatpush1.bf16.msra.mxu0 0
        %1094 = vmatprep.subr.bf16.mxu0 0
        %1095 = vmatpush1.bf16.msra.mxu0 0
        %1096 = vmatprep.subr.bf16.mxu0 0
        %1097 = vmatpush1.bf16.msra.mxu0 0
        %1098 = vmatprep.subr.bf16.mxu0 0
        %1099 = vmatpush1.bf16.msra.mxu0 0
        %1100 = vmatprep.subr.bf16.mxu0 0
        %1101 = vmatpush1.bf16.msra.mxu0 0
        %1102 = vmatprep.subr.bf16.mxu0 0
        %1103 = vmatpush1.bf16.msra.mxu0 0
        %1104 = vmatprep.subr.bf16.mxu0 0
        %1105 = vmatpush1.bf16.msra.mxu0 0
        %1106 = vmatprep.subr.bf16.mxu0 0
        %1107 = vmatpush1.bf16.msra.mxu0 0
        %1108 = vmatprep.mubr.bf16.mxu0 0
        %1109 = vmatmul.mubr.bf16.gmra.mrb[0].mxu0 %v1074
        %v1110 = vpop.f32.mrb[0].mxu0
        %v1111 = vadd.f32 0.0, %v1110
        %v1112 = vpop.f32.mrb[0].mxu0
        %v1113 = vpop.f32.mrb[0].mxu0
        %v1114 = vadd.f32 0.0, %v1113
        %v1115 = vpop.f32.mrb[0].mxu0
        %1116 = vdwg.mxu0
        %v1117 = vrcp.pop %v1065
        %v1118 = vrcp.pop %v1068
        %v1119 = vmul.f32 %v1111, %v1117
        %v1120 = vmul.f32 %v1114, %v1118
        %v1121 = vpack.c.bf16 %v1120, %v1119
        %v1123 = vrot.slane %v382, 4
        %v1125 = vsel %vm488, %v1121, 0
        %v1128 = vsel %vm737, %v1123, 0
        %1130 = vmatprep.subr.bf16.mxu0 0
        %1131 = vmatpush1.bf16.msra.mxu0 %v1128
        %1132 = vmatprep.subr.bf16.mxu0 0
        %1133 = vmatpush1.bf16.msra.mxu0 0
        %1134 = vmatprep.subr.bf16.mxu0 0
        %1135 = vmatpush1.bf16.msra.mxu0 0
        %1136 = vmatprep.subr.bf16.mxu0 0
        %1137 = vmatpush1.bf16.msra.mxu0 0
        %1138 = vmatprep.subr.bf16.mxu0 0
        %1139 = vmatpush1.bf16.msra.mxu0 0
        %1140 = vmatprep.subr.bf16.mxu0 0
        %1141 = vmatpush1.bf16.msra.mxu0 0
        %1142 = vmatprep.subr.bf16.mxu0 0
        %1143 = vmatpush1.bf16.msra.mxu0 0
        %1144 = vmatprep.subr.bf16.mxu0 0
        %1145 = vmatpush1.bf16.msra.mxu0 0
        %1146 = vmatprep.subr.bf16.mxu0 0
        %1147 = vmatpush1.bf16.msra.mxu0 0
        %1148 = vmatprep.subr.bf16.mxu0 0
        %1149 = vmatpush1.bf16.msra.mxu0 0
        %1150 = vmatprep.subr.bf16.mxu0 0
        %1151 = vmatpush1.bf16.msra.mxu0 0
        %1152 = vmatprep.subr.bf16.mxu0 0
        %1153 = vmatpush1.bf16.msra.mxu0 0
        %1154 = vmatprep.subr.bf16.mxu0 0
        %1155 = vmatpush1.bf16.msra.mxu0 0
        %1156 = vmatprep.subr.bf16.mxu0 0
        %1157 = vmatpush1.bf16.msra.mxu0 0
        %1158 = vmatprep.subr.bf16.mxu0 0
        %1159 = vmatpush1.bf16.msra.mxu0 0
        %1160 = vmatprep.subr.bf16.mxu0 0
        %1161 = vmatpush1.bf16.msra.mxu0 0
        %1162 = vmatprep.mubr.bf16.mxu0 0
        %1163 = vmatmul.mubr.bf16.gmra.mrb[0].mxu0 %v1125
        %v1164 = vpop.f32.mrb[0].mxu0
        %v1165 = vadd.f32 0.0, %v1164
        %v1166 = vpop.f32.mrb[0].mxu0
        %v1167 = vpop.f32.mrb[0].mxu0
        %v1168 = vadd.f32 0.0, %v1167
        %v1169 = vpop.f32.mrb[0].mxu0
        %1170 = vdwg.mxu0
        %v1171 = vadd.f32 %v998, %v1165
        %v1172 = vadd.f32 %v999, %v1168
        %v1173 = vld [vmem:[%s6] sm:$0x1]
        %v1175 = vlaneseq
        %v1176 = vshrl.u32 %v1175, 7
        %v1177 = vsub.s32 0, %v1176
        %v1178 = vrot.slane %v1173, %v1177
        %v1180 = vadd.f32 %v1171, %v1178
        %v1181 = vadd.f32 %v1172, %v1178
        %1182 = vst.msk [vmem:[%s354] sm:$0xff] %vm390, %v1180
        %1183 = vst.msk [vmem:[%s354 + $0x8] sm:$0xff] %vm390, %v1181
        %s1184 = sand.u32 %s200, 1
        %s1185 = scalar_lea.sflag [#allocation4], %s1184
        %s1186 = sand.u32 %s200, 1
        %s1187 = smul.addr %s1186, 16
        %s1188 = scalar_lea.vmem [#allocation10], %s1187
        // Predicated region
        $region65: #{tpu_custom_call.1} parent=47 // pred_check
          %p1189 = pneg %p210
        $region66: #{tpu_custom_call.1} parent=47 // pred_check_branch
          %1191 = sbr.rel (%p1189) target = $region68
        $region67: #{tpu_custom_call.1} parent=47 // pred_region
          %s1192 = smul.u32 2, %s31
          %s1194 = ssub.s32 256, 256
          %1195 = vsyncadd %s1185, %s1194
          %s1196 = smul.addr %s30, 2
          %s1197 = sadd.s32 %s1192, %s1196
          %s1198 = smul.addr %s1197, 128
          %s1199 = scalar_lea.hbm %s7, %s1198
          %s1200 = sshll.u32 %s1188, 4
          %s1201 = int_to_ptr.vmem [resolvable:$true] %s1200
          %1206 = dma.vmem_to_hbm [thread:$0]  %s1201, 256, %s1199, %s1185, 128, 128, 8
        $region68: #{tpu_custom_call.1} parent=47 // pred_fallthru
          _
      $region48: #{tpu_custom_call.1} parent=5 // pred_fallthru
        _
      %p1207 = scmp.le.s32.totalorder 2, %s21
      // Predicated region
      $region69: #{tpu_custom_call.1} parent=5 // pred_check
        %p1208 = pneg %p1207
      $region70: #{tpu_custom_call.1} parent=5 // pred_check_branch
        %1210 = sbr.rel (%p1208) target = $region72
      $region71: #{tpu_custom_call.1} parent=5 // pred_region
        %s1211 = ssub.s32 %s21, 2
        // Predicated region
        $region73: #{tpu_custom_call.1} parent=71 // pred_check
          %p1212 = pneg %p216
        $region74: #{tpu_custom_call.1} parent=71 // pred_check_branch
          %1214 = sbr.rel (%p1212) target = $region76
        $region75: #{tpu_custom_call.1} parent=71 // pred_region
          %s1215 = sand.u32 %s201, 1
          %s1216 = scalar_lea.sflag [#allocation4], %s1215
          %s1217 = sand.u32 %s201, 1
          %s1218 = smul.addr %s1217, 16
          %s1219 = scalar_lea.vmem [#allocation10], %s1218
          %1220 = dma.done %s1216, 256
        $region76: #{tpu_custom_call.1} parent=71 // pred_fallthru
          _
      $region72: #{tpu_custom_call.1} parent=5 // pred_fallthru
        _
    $region6: #{tpu_custom_call.1} parent=1 // loop_footer
      %s25 = sadd.s32 1, %s21
    $region7: #{tpu_custom_call.1} parent=1 // loop_footer_branch
      %20 = sbr.rel target = $region3
    $region8: #{tpu_custom_call.1} parent=1 // loop_exit
      _
    %1221 = vsyncpa [#allocation3], 1
    %s1222 = scalar_lea.sflag [#allocation3], 1
    %1223 = vsyncpa %s1222, 1
    %1224 = vsyncpa [#allocation6], 1
    %1225 = vsyncpa [#allocation9], 1
    %1226 = vsyncpa [#allocation4], 1
    %s1227 = scalar_lea.sflag [#allocation4], 1
    %1228 = vsyncpa %s1227, 1

</llo_original>
